<compile_context>
chip_gen: v6e
topology: v6e:2x2x1
jax: 0.10.0
libtpu: 0.0.40
codegen_flags: <defaults>
</compile_context>

<pallas_src>
import functools

import numpy as np

import jax
import jax.numpy as jnp
from jax import lax
from jax.experimental import pallas as pl
from jax.experimental.pallas import tpu as pltpu


def _encoder2_kernel(x_ref, mask_ref, w1_ref, b1_ref, w2_ref, b2_ref, o_ref, stk_ref,
                     *, dil, wp, fp, bsz):
    # x_ref   : (bsz, Cin, Fp)   zero-padded, flattened input frames (lane axis = Fp)
    # mask_ref: (1, Fp)          1.0 at interior (non-pad) frame positions, else 0.0
    # w1_ref  : (C1, 9*Cin)      stacked-tap weights, column order (dy*3+dx)*Cin + c
    # w2_ref  : (Cout, 9*C1)
    # b*_ref  : (C, 1)
    # o_ref   : (bsz, Cout, Fp)  output in the same padded frame (lane-dense stores)
    # stk_ref : (9*max(Cin,C1), bsz*Fp) VMEM scratch holding the stacked dilated taps
    cin = x_ref.shape[1]
    c1 = w1_ref.shape[0]
    lanes = bsz * fp
    # tap k = dy*3 + dx: output frame position p reads input frame position p + off_k
    offs = [((dy - 1) * wp + (dx - 1)) * dil for dy in range(3) for dx in range(3)]

    # ---- layer 1: build stacked taps, folding the batch onto the lane axis ----------
    for b in range(bsz):
        xb = x_ref[b].astype(jnp.float32)                            # (Cin, Fp)
        for k, off in enumerate(offs):
            t = xb if off == 0 else pltpu.roll(xb, (-off) % fp, axis=1)
            stk_ref[k * cin:(k + 1) * cin, b * fp:(b + 1) * fp] = t

    # one MXU matmul for the whole layer; bias added once to the dot result
    h = jnp.dot(w1_ref[...], stk_ref[:9 * cin, :],
                preferred_element_type=jnp.float32) + b1_ref[...]    # (C1, bsz*Fp)

    # ReLU, then re-zero the frame border so it acts as zero padding for layer 2
    mask = mask_ref[...]                                             # (1, Fp)
    if bsz > 1:
        mask = jnp.concatenate([mask] * bsz, axis=1)                 # (1, bsz*Fp)
    h = jnp.maximum(h, 0.0) * mask

    # ---- layer 2: rolls act on the folded lane axis (safe: interior outputs never read
    # past their own Fp-aligned frame; cross-frame wraps only hit cropped positions) ----
    for k, off in enumerate(offs):
        t = h if off == 0 else pltpu.roll(h, (-off) % lanes, axis=1)
        stk_ref[k * c1:(k + 1) * c1, :] = t

    o = jnp.dot(w2_ref[...], stk_ref[:9 * c1, :],
                preferred_element_type=jnp.float32) + b2_ref[...]    # (Cout, bsz*Fp)
    # no output mask: the wrapper slices [:s] and crops the border
    for b in range(bsz):
        o_ref[b] = o[:, b * fp:(b + 1) * fp].astype(o_ref.dtype)


def prepare_conv_params(params_oihw):
    """Hoisted (call once): (w OIHW, b) -> ((Cout, 9*Cin) stacked-tap weights, (Cout,1) bias).

    Column order of the stacked weights matches the scratch row order used in the kernel:
    column (dy*3 + dx)*Cin + c  <-  w[o, c, dy, dx].
    """
    prepared = []
    for w_oihw, b in params_oihw:
        o_, i_, kh, kw = w_oihw.shape
        assert kh == 3 and kw == 3, "ConvEncoder2 uses 3x3 kernels"
        w_stk = jnp.transpose(w_oihw, (0, 2, 3, 1)).reshape(o_, kh * kw * i_)
        prepared.append((w_stk.astype(jnp.float32),
                         b.reshape(-1, 1).astype(jnp.float32)))
    return tuple(prepared)


def conv_encoder2_pallas(x_nchw, prepared_params, dilation):
    """Forward pass of ConvEncoder2. prepared_params from prepare_conv_params()."""
    (w1, b1), (w2, b2) = prepared_params
    n, cin, h, w = x_nchw.shape
    c1 = w1.shape[0]
    cout = w2.shape[0]
    d = int(dilation)
    hp, wp = h + 2 * d, w + 2 * d
    s = hp * wp
    fp = ((s + 127) // 128) * 128            # lane-dense frame width (multiple of 128)

    # samples per grid block: fold the batch onto the lane axis to amortize per-grid-step
    # overhead, but keep >= 2 blocks so v7x's 2 TensorCores both get work.
    nblk = 2 if n >= 2 else 1
    bsz = -(-n // nblk)                      # ceil(n / nblk)
    n_pad = nblk * bsz

    # Glue: zero-pad (batch tail + spatial border) in one pad, flatten each sample to the
    # padded frame, then pad the lane axis up to a multiple of 128 (skipped when already
    # aligned).  All shapes are static; under jit these fuse into the operand layout.
    xp = jnp.pad(x_nchw, ((0, n_pad - n), (0, 0), (d, d), (d, d)))
    xf = xp.reshape(n_pad, cin, s)
    if fp != s:
        xf = jnp.pad(xf, ((0, 0), (0, 0), (0, fp - s)))

    # Interior-position mask for one frame (compile-time numpy constant; kept as a tiny
    # (1, Fp) operand rather than generated in-kernel to avoid vector int div/mod — its
    # 2 KiB DMA is negligible and hides under the matmuls).
    ids = np.arange(fp)
    yy, xx = ids // wp, ids % wp
    valid = (ids < s) & (yy >= d) & (yy < d + h) & (xx >= d) & (xx < d + w)
    mask = jnp.asarray(valid.astype(np.float32).reshape(1, fp))

    kernel = functools.partial(_encoder2_kernel, dil=d, wp=wp, fp=fp, bsz=bsz)

    flops = 2 * 9 * (c1 * cin + cout * c1) * s * n_pad
    bytes_accessed = 4 * (n_pad * cin * fp + n_pad * cout * fp
                          + w1.size + b1.size + w2.size + b2.size + fp)

    out_flat = pl.pallas_call(
        kernel,
        out_shape=jax.ShapeDtypeStruct((n_pad, cout, fp), x_nchw.dtype),
        grid=(nblk,),
        in_specs=[
            pl.BlockSpec((bsz, cin, fp), lambda i: (i, 0, 0)),
            pl.BlockSpec((1, fp), lambda i: (0, 0)),
            pl.BlockSpec(w1.shape, lambda i: (0, 0)),
            pl.BlockSpec(b1.shape, lambda i: (0, 0)),
            pl.BlockSpec(w2.shape, lambda i: (0, 0)),
            pl.BlockSpec(b2.shape, lambda i: (0, 0)),
        ],
        out_specs=pl.BlockSpec((bsz, cout, fp), lambda i: (i, 0, 0)),
        scratch_shapes=[pltpu.VMEM((9 * max(cin, c1), bsz * fp), jnp.float32)],
        compiler_params=pltpu.CompilerParams(
            dimension_semantics=("parallel",)),          # shard batch blocks over v7x's 2 TCs
        cost_estimate=pl.CostEstimate(flops=flops, transcendentals=0,
                                      bytes_accessed=bytes_accessed),
    )(xf, mask, w1, b1, w2, b2)

    # Un-flatten the padded frame and drop the border -> NCHW, no transpose needed.
    out = out_flat[:n, :, :s].reshape(n, cout, hp, wp)
    return out[:, :, d:d + h, d:d + w]


def conv_encoder2_ref(x_nchw, params, dilation):
    # Pure-JAX reference matching PyTorch nn.Conv2d(kernel=3, dilation=d, padding=d).
    d = dilation
    (w1, b1), (w2, b2) = params

    def conv(x, wgt, b):
        y = lax.conv_general_dilated(
            x, wgt, window_strides=(1, 1), padding=((d, d), (d, d)),
            rhs_dilation=(d, d), dimension_numbers=("NCHW", "OIHW", "NCHW"),
            precision=jax.lax.Precision.HIGHEST)
        return y + b[None, :, None, None]

    h = jnp.maximum(conv(x_nchw, w1, b1), 0.0)
    return conv(h, w2, b2)


def init_conv_params(key, cin, cout):
    # Deterministic init matching PyTorch Conv2d param shapes: w (Cout,Cin,3,3), b (Cout,)
    kw, kb = jax.random.split(key)
    fan_in = cin * 9
    bound = 1.0 / (fan_in ** 0.5)
    w = jax.random.uniform(kw, (cout, cin, 3, 3), jnp.float32, -bound, bound)
    b = jax.random.uniform(kb, (cout,), jnp.float32, -bound, bound)
    return w, b


if __name__ == "__main__":
    key = jax.random.PRNGKey(0)
    k_x, k1, k2 = jax.random.split(key, 3)

    # ConvEncoder2(num_input_channels=4, num_output_channels=8, dilation=2)
    N, Cin, H, W = 2, 4, 16, 16
    Cout = 8
    internal = Cout                      # internal_channels = num_output_channels
    dilation = 2

    x = jax.random.normal(k_x, (N, Cin, H, W), jnp.float32)
    params = [
        init_conv_params(k1, Cin, internal * 2),   # 4  -> 16
        init_conv_params(k2, internal * 2, Cout),  # 16 -> 8
    ]

    prepared = prepare_conv_params(params)         # hoisted out of the forward path
    fwd = jax.jit(lambda xx, pp: conv_encoder2_pallas(xx, pp, dilation))

    out = jax.block_until_ready(fwd(x, prepared))
    ref = conv_encoder2_ref(x, params, dilation)

    assert out.shape == (N, Cout, H, W), out.shape
    assert out.dtype == jnp.float32
    max_err = float(jnp.max(jnp.abs(out - ref)))
    assert jnp.allclose(out, ref, atol=1e-4, rtol=1e-4), max_err
    print("KERNEL_OK")
</pallas_src>

<mosaic_0001>
module attributes {stable_mosaic.version = 11 : i64} {
  func.func @_encoder2_kernel(%arg0: i32, %arg1: memref<1x4x512xf32, #tpu.memory_space<vmem>>, %arg2: memref<1x512xf32, #tpu.memory_space<vmem>>, %arg3: memref<16x36xf32, #tpu.memory_space<vmem>>, %arg4: memref<16x1xf32, #tpu.memory_space<vmem>>, %arg5: memref<8x144xf32, #tpu.memory_space<vmem>>, %arg6: memref<8x1xf32, #tpu.memory_space<vmem>>, %arg7: memref<1x8x512xf32, #tpu.memory_space<vmem>>, %arg8: memref<144x512xf32, #tpu.memory_space<vmem>>) attributes {dimension_semantics = [#tpu.dimension_semantics<parallel>], iteration_bounds = array<i64: 2>, scalar_prefetch = 0 : i64, scratch_operands = 1 : i64, tpu.core_type = #tpu.core_type<tc>, window_params = [{transform_indices = @transform_0, window_bounds = array<i64: 1, 4, 512>}, {pipeline_mode = #tpu.pipeline_mode<synchronous>, transform_indices = @transform_1, window_bounds = array<i64: 1, 512>}, {pipeline_mode = #tpu.pipeline_mode<synchronous>, transform_indices = @transform_2, window_bounds = array<i64: 16, 36>}, {pipeline_mode = #tpu.pipeline_mode<synchronous>, transform_indices = @transform_3, window_bounds = array<i64: 16, 1>}, {pipeline_mode = #tpu.pipeline_mode<synchronous>, transform_indices = @transform_4, window_bounds = array<i64: 8, 144>}, {pipeline_mode = #tpu.pipeline_mode<synchronous>, transform_indices = @transform_5, window_bounds = array<i64: 8, 1>}, {transform_indices = @transform_6, window_bounds = array<i64: 1, 8, 512>}]} {
    %c0 = arith.constant 0 : index
    %c0_0 = arith.constant 0 : index
    %c0_1 = arith.constant 0 : index
    %0 = vector.load %arg1[%c0, %c0_0, %c0_1] : memref<1x4x512xf32, #tpu.memory_space<vmem>>, vector<1x4x512xf32>
    %1 = vector.shape_cast %0 : vector<1x4x512xf32> to vector<4x512xf32>
    %c42_i32 = arith.constant 42 : i32
    %2 = tpu.dynamic_rotate %1 by %c42_i32 dim 1 : vector<4x512xf32>, i32 -> vector<4x512xf32>
    %c0_2 = arith.constant 0 : index
    %c0_3 = arith.constant 0 : index
    %3 = vector.load %arg8[%c0_2, %c0_3] : memref<144x512xf32, #tpu.memory_space<vmem>>, vector<4x512xf32>
    tpu.vector_store %arg8[%c0_2, %c0_3], %2 {strides = array<i32>} : memref<144x512xf32, #tpu.memory_space<vmem>>, vector<4x512xf32>,
    %c40_i32 = arith.constant 40 : i32
    %4 = tpu.dynamic_rotate %1 by %c40_i32 dim 1 : vector<4x512xf32>, i32 -> vector<4x512xf32>
    %c4 = arith.constant 4 : index
    %c0_4 = arith.constant 0 : index
    %5 = vector.load %arg8[%c4, %c0_4] : memref<144x512xf32, #tpu.memory_space<vmem>>, vector<4x512xf32>
    tpu.vector_store %arg8[%c4, %c0_4], %4 {strides = array<i32>} : memref<144x512xf32, #tpu.memory_space<vmem>>, vector<4x512xf32>,
    %c38_i32 = arith.constant 38 : i32
    %6 = tpu.dynamic_rotate %1 by %c38_i32 dim 1 : vector<4x512xf32>, i32 -> vector<4x512xf32>
    %c8 = arith.constant 8 : index
    %c0_5 = arith.constant 0 : index
    %7 = vector.load %arg8[%c8, %c0_5] : memref<144x512xf32, #tpu.memory_space<vmem>>, vector<4x512xf32>
    tpu.vector_store %arg8[%c8, %c0_5], %6 {strides = array<i32>} : memref<144x512xf32, #tpu.memory_space<vmem>>, vector<4x512xf32>,
    %c2_i32 = arith.constant 2 : i32
    %8 = tpu.dynamic_rotate %1 by %c2_i32 dim 1 : vector<4x512xf32>, i32 -> vector<4x512xf32>
    %c12 = arith.constant 12 : index
    %c0_6 = arith.constant 0 : index
    %9 = vector.load %arg8[%c12, %c0_6] : memref<144x512xf32, #tpu.memory_space<vmem>>, vector<4x512xf32>
    tpu.vector_store %arg8[%c12, %c0_6], %8 {strides = array<i32>} : memref<144x512xf32, #tpu.memory_space<vmem>>, vector<4x512xf32>,
    %c16 = arith.constant 16 : index
    %c0_7 = arith.constant 0 : index
    %10 = vector.load %arg8[%c16, %c0_7] : memref<144x512xf32, #tpu.memory_space<vmem>>, vector<4x512xf32>
    tpu.vector_store %arg8[%c16, %c0_7], %1 {strides = array<i32>} : memref<144x512xf32, #tpu.memory_space<vmem>>, vector<4x512xf32>,
    %c510_i32 = arith.constant 510 : i32
    %11 = tpu.dynamic_rotate %1 by %c510_i32 dim 1 : vector<4x512xf32>, i32 -> vector<4x512xf32>
    %c20 = arith.constant 20 : index
    %c0_8 = arith.constant 0 : index
    %12 = vector.load %arg8[%c20, %c0_8] : memref<144x512xf32, #tpu.memory_space<vmem>>, vector<4x512xf32>
    tpu.vector_store %arg8[%c20, %c0_8], %11 {strides = array<i32>} : memref<144x512xf32, #tpu.memory_space<vmem>>, vector<4x512xf32>,
    %c474_i32 = arith.constant 474 : i32
    %13 = tpu.dynamic_rotate %1 by %c474_i32 dim 1 : vector<4x512xf32>, i32 -> vector<4x512xf32>
    %c24 = arith.constant 24 : index
    %c0_9 = arith.constant 0 : index
    %14 = vector.load %arg8[%c24, %c0_9] : memref<144x512xf32, #tpu.memory_space<vmem>>, vector<4x512xf32>
    tpu.vector_store %arg8[%c24, %c0_9], %13 {strides = array<i32>} : memref<144x512xf32, #tpu.memory_space<vmem>>, vector<4x512xf32>,
    %c472_i32 = arith.constant 472 : i32
    %15 = tpu.dynamic_rotate %1 by %c472_i32 dim 1 : vector<4x512xf32>, i32 -> vector<4x512xf32>
    %c28 = arith.constant 28 : index
    %c0_10 = arith.constant 0 : index
    %16 = vector.load %arg8[%c28, %c0_10] : memref<144x512xf32, #tpu.memory_space<vmem>>, vector<4x512xf32>
    tpu.vector_store %arg8[%c28, %c0_10], %15 {strides = array<i32>} : memref<144x512xf32, #tpu.memory_space<vmem>>, vector<4x512xf32>,
    %c470_i32 = arith.constant 470 : i32
    %17 = tpu.dynamic_rotate %1 by %c470_i32 dim 1 : vector<4x512xf32>, i32 -> vector<4x512xf32>
    %c32 = arith.constant 32 : index
    %c0_11 = arith.constant 0 : index
    %18 = vector.load %arg8[%c32, %c0_11] : memref<144x512xf32, #tpu.memory_space<vmem>>, vector<4x512xf32>
    tpu.vector_store %arg8[%c32, %c0_11], %17 {strides = array<i32>} : memref<144x512xf32, #tpu.memory_space<vmem>>, vector<4x512xf32>,
    %c0_12 = arith.constant 0 : index
    %c0_13 = arith.constant 0 : index
    %19 = vector.load %arg3[%c0_12, %c0_13] : memref<16x36xf32, #tpu.memory_space<vmem>>, vector<16x36xf32>
    %c0_14 = arith.constant 0 : index
    %c0_15 = arith.constant 0 : index
    %20 = vector.load %arg8[%c0_14, %c0_15] : memref<144x512xf32, #tpu.memory_space<vmem>>, vector<36x512xf32>
    %cst = arith.constant dense<0.000000e+00> : vector<16x512xf32>
    %21 = tpu.matmul %19, %20, %cst {dimension_numbers = #tpu.dot_dimension_numbers<[1], [0], [0], [1], [0, 0, 1, 1], [], []>} : vector<16x36xf32>, vector<36x512xf32>, vector<16x512xf32> -> vector<16x512xf32>
    %c0_16 = arith.constant 0 : index
    %c0_17 = arith.constant 0 : index
    %22 = vector.load %arg4[%c0_16, %c0_17] : memref<16x1xf32, #tpu.memory_space<vmem>>, vector<16x1xf32>
    %23 = vector.broadcast %22 : vector<16x1xf32> to vector<16x512xf32>
    %24 = arith.addf %21, %23 : vector<16x512xf32>
    %c0_18 = arith.constant 0 : index
    %c0_19 = arith.constant 0 : index
    %25 = vector.load %arg2[%c0_18, %c0_19] : memref<1x512xf32, #tpu.memory_space<vmem>>, vector<1x512xf32>
    %cst_20 = arith.constant 0.000000e+00 : f32
    %26 = vector.broadcast %cst_20 : f32 to vector<16x512xf32>
    %27 = arith.maximumf %24, %26 : vector<16x512xf32>
    %28 = vector.broadcast %25 : vector<1x512xf32> to vector<16x512xf32>
    %29 = arith.mulf %27, %28 : vector<16x512xf32>
    %c42_i32_21 = arith.constant 42 : i32
    %30 = tpu.dynamic_rotate %29 by %c42_i32_21 dim 1 : vector<16x512xf32>, i32 -> vector<16x512xf32>
    %c0_22 = arith.constant 0 : index
    %c0_23 = arith.constant 0 : index
    %31 = vector.load %arg8[%c0_22, %c0_23] : memref<144x512xf32, #tpu.memory_space<vmem>>, vector<16x512xf32>
    tpu.vector_store %arg8[%c0_22, %c0_23], %30 {strides = array<i32>} : memref<144x512xf32, #tpu.memory_space<vmem>>, vector<16x512xf32>,
    %c40_i32_24 = arith.constant 40 : i32
    %32 = tpu.dynamic_rotate %29 by %c40_i32_24 dim 1 : vector<16x512xf32>, i32 -> vector<16x512xf32>
    %c16_25 = arith.constant 16 : index
    %c0_26 = arith.constant 0 : index
    %33 = vector.load %arg8[%c16_25, %c0_26] : memref<144x512xf32, #tpu.memory_space<vmem>>, vector<16x512xf32>
    tpu.vector_store %arg8[%c16_25, %c0_26], %32 {strides = array<i32>} : memref<144x512xf32, #tpu.memory_space<vmem>>, vector<16x512xf32>,
    %c38_i32_27 = arith.constant 38 : i32
    %34 = tpu.dynamic_rotate %29 by %c38_i32_27 dim 1 : vector<16x512xf32>, i32 -> vector<16x512xf32>
    %c32_28 = arith.constant 32 : index
    %c0_29 = arith.constant 0 : index
    %35 = vector.load %arg8[%c32_28, %c0_29] : memref<144x512xf32, #tpu.memory_space<vmem>>, vector<16x512xf32>
    tpu.vector_store %arg8[%c32_28, %c0_29], %34 {strides = array<i32>} : memref<144x512xf32, #tpu.memory_space<vmem>>, vector<16x512xf32>,
    %c2_i32_30 = arith.constant 2 : i32
    %36 = tpu.dynamic_rotate %29 by %c2_i32_30 dim 1 : vector<16x512xf32>, i32 -> vector<16x512xf32>
    %c48 = arith.constant 48 : index
    %c0_31 = arith.constant 0 : index
    %37 = vector.load %arg8[%c48, %c0_31] : memref<144x512xf32, #tpu.memory_space<vmem>>, vector<16x512xf32>
    tpu.vector_store %arg8[%c48, %c0_31], %36 {strides = array<i32>} : memref<144x512xf32, #tpu.memory_space<vmem>>, vector<16x512xf32>,
    %c64 = arith.constant 64 : index
    %c0_32 = arith.constant 0 : index
    %38 = vector.load %arg8[%c64, %c0_32] : memref<144x512xf32, #tpu.memory_space<vmem>>, vector<16x512xf32>
    tpu.vector_store %arg8[%c64, %c0_32], %29 {strides = array<i32>} : memref<144x512xf32, #tpu.memory_space<vmem>>, vector<16x512xf32>,
    %c510_i32_33 = arith.constant 510 : i32
    %39 = tpu.dynamic_rotate %29 by %c510_i32_33 dim 1 : vector<16x512xf32>, i32 -> vector<16x512xf32>
    %c80 = arith.constant 80 : index
    %c0_34 = arith.constant 0 : index
    %40 = vector.load %arg8[%c80, %c0_34] : memref<144x512xf32, #tpu.memory_space<vmem>>, vector<16x512xf32>
    tpu.vector_store %arg8[%c80, %c0_34], %39 {strides = array<i32>} : memref<144x512xf32, #tpu.memory_space<vmem>>, vector<16x512xf32>,
    %c474_i32_35 = arith.constant 474 : i32
    %41 = tpu.dynamic_rotate %29 by %c474_i32_35 dim 1 : vector<16x512xf32>, i32 -> vector<16x512xf32>
    %c96 = arith.constant 96 : index
    %c0_36 = arith.constant 0 : index
    %42 = vector.load %arg8[%c96, %c0_36] : memref<144x512xf32, #tpu.memory_space<vmem>>, vector<16x512xf32>
    tpu.vector_store %arg8[%c96, %c0_36], %41 {strides = array<i32>} : memref<144x512xf32, #tpu.memory_space<vmem>>, vector<16x512xf32>,
    %c472_i32_37 = arith.constant 472 : i32
    %43 = tpu.dynamic_rotate %29 by %c472_i32_37 dim 1 : vector<16x512xf32>, i32 -> vector<16x512xf32>
    %c112 = arith.constant 112 : index
    %c0_38 = arith.constant 0 : index
    %44 = vector.load %arg8[%c112, %c0_38] : memref<144x512xf32, #tpu.memory_space<vmem>>, vector<16x512xf32>
    tpu.vector_store %arg8[%c112, %c0_38], %43 {strides = array<i32>} : memref<144x512xf32, #tpu.memory_space<vmem>>, vector<16x512xf32>,
    %c470_i32_39 = arith.constant 470 : i32
    %45 = tpu.dynamic_rotate %29 by %c470_i32_39 dim 1 : vector<16x512xf32>, i32 -> vector<16x512xf32>
    %c128 = arith.constant 128 : index
    %c0_40 = arith.constant 0 : index
    %46 = vector.load %arg8[%c128, %c0_40] : memref<144x512xf32, #tpu.memory_space<vmem>>, vector<16x512xf32>
    tpu.vector_store %arg8[%c128, %c0_40], %45 {strides = array<i32>} : memref<144x512xf32, #tpu.memory_space<vmem>>, vector<16x512xf32>,
    %c0_41 = arith.constant 0 : index
    %c0_42 = arith.constant 0 : index
    %47 = vector.load %arg5[%c0_41, %c0_42] : memref<8x144xf32, #tpu.memory_space<vmem>>, vector<8x144xf32>
    %c0_43 = arith.constant 0 : index
    %c0_44 = arith.constant 0 : index
    %48 = vector.load %arg8[%c0_43, %c0_44] : memref<144x512xf32, #tpu.memory_space<vmem>>, vector<144x512xf32>
    %cst_45 = arith.constant dense<0.000000e+00> : vector<8x512xf32>
    %49 = tpu.matmul %47, %48, %cst_45 {dimension_numbers = #tpu.dot_dimension_numbers<[1], [0], [0], [1], [0, 0, 1, 1], [], []>} : vector<8x144xf32>, vector<144x512xf32>, vector<8x512xf32> -> vector<8x512xf32>
    %c0_46 = arith.constant 0 : index
    %c0_47 = arith.constant 0 : index
    %50 = vector.load %arg6[%c0_46, %c0_47] : memref<8x1xf32, #tpu.memory_space<vmem>>, vector<8x1xf32>
    %51 = vector.broadcast %50 : vector<8x1xf32> to vector<8x512xf32>
    %52 = arith.addf %49, %51 : vector<8x512xf32>
    %c0_48 = arith.constant 0 : index
    %c0_49 = arith.constant 0 : index
    %c0_50 = arith.constant 0 : index
    %53 = vector.load %arg7[%c0_48, %c0_49, %c0_50] : memref<1x8x512xf32, #tpu.memory_space<vmem>>, vector<1x8x512xf32>
    %54 = vector.shape_cast %53 : vector<1x8x512xf32> to vector<8x512xf32>
    %55 = vector.shape_cast %52 : vector<8x512xf32> to vector<1x8x512xf32>
    tpu.vector_store %arg7[%c0_48, %c0_49, %c0_50], %55 {strides = array<i32>} : memref<1x8x512xf32, #tpu.memory_space<vmem>>, vector<1x8x512xf32>,
    return
  }
  func.func @transform_0(%arg0: i32) -> (i32, i32, i32) {
    %c0_i32 = arith.constant 0 : i32
    %c0_i32_0 = arith.constant 0 : i32
    %c0_i32_1 = arith.constant 0 : i32
    return %arg0, %c0_i32, %c0_i32_0 : i32, i32, i32
  }
  func.func @transform_1(%arg0: i32) -> (i32, i32) {
    %c0_i32 = arith.constant 0 : i32
    %c0_i32_0 = arith.constant 0 : i32
    %c0_i32_1 = arith.constant 0 : i32
    return %c0_i32, %c0_i32_0 : i32, i32
  }
  func.func @transform_2(%arg0: i32) -> (i32, i32) {
    %c0_i32 = arith.constant 0 : i32
    %c0_i32_0 = arith.constant 0 : i32
    %c0_i32_1 = arith.constant 0 : i32
    return %c0_i32, %c0_i32_0 : i32, i32
  }
  func.func @transform_3(%arg0: i32) -> (i32, i32) {
    %c0_i32 = arith.constant 0 : i32
    %c0_i32_0 = arith.constant 0 : i32
    %c0_i32_1 = arith.constant 0 : i32
    return %c0_i32, %c0_i32_0 : i32, i32
  }
  func.func @transform_4(%arg0: i32) -> (i32, i32) {
    %c0_i32 = arith.constant 0 : i32
    %c0_i32_0 = arith.constant 0 : i32
    %c0_i32_1 = arith.constant 0 : i32
    return %c0_i32, %c0_i32_0 : i32, i32
  }
  func.func @transform_5(%arg0: i32) -> (i32, i32) {
    %c0_i32 = arith.constant 0 : i32
    %c0_i32_0 = arith.constant 0 : i32
    %c0_i32_1 = arith.constant 0 : i32
    return %c0_i32, %c0_i32_0 : i32, i32
  }
  func.func @transform_6(%arg0: i32) -> (i32, i32, i32) {
    %c0_i32 = arith.constant 0 : i32
    %c0_i32_0 = arith.constant 0 : i32
    %c0_i32_1 = arith.constant 0 : i32
    return %arg0, %c0_i32, %c0_i32_0 : i32, i32, i32
  }
}

</mosaic_0001>

<llo_original>
// kernel: _lambda_.1
$region0: #{_lambda_.1}
  #allocation0 [shape = 'u32[]', space=smem, size = 0x4, offset = 0x4, fixed_abs, tag = 'smem constant byte address 0x4 - core index']
  #allocation1 [shape = 'u32[144,128]{1,0:T(1,128)}', space=vmem, size = 0x12000, scoped, tag = 'internal scratch']
  #allocation2 [shape = 'f32[144,512]{1,0:T(8,128)}', space=vmem, size = 0x48000, scoped, tag = 'scratch operand']
  %s0 = inlined_call_operand.vmem [shape: f32[2,4,512], index: 0, kind: input, shape index: {}]
  %s1 = inlined_call_operand.vmem [shape: f32[1,512], index: 1, kind: input, shape index: {}]
  %s2 = inlined_call_operand.vmem [shape: f32[16,36], index: 2, kind: input, shape index: {}]
  %s3 = inlined_call_operand.vmem [shape: f32[16,1], index: 3, kind: input, shape index: {}]
  %s4 = inlined_call_operand.vmem [shape: f32[8,144], index: 4, kind: input, shape index: {}]
  %s5 = inlined_call_operand.vmem [shape: f32[8,1], index: 5, kind: input, shape index: {}]
  %s6 = inlined_call_operand.vmem [shape: f32[2,8,512], index: 6, kind: output, shape index: {}]
  %s7 = sld [smem:[#allocation0]]
  $region57: #{_lambda_.1} parent=0
    _
  %s9 = ssub.s32 1, %s7
  %s10 = scalar_select 0, %s9, %s7
  loop: start=0, step=1, limit=4
  $region2: #{_lambda_.1} parent=0 // loop_pre_header
    _
  $region3: #{_lambda_.1} parent=0 // loop_header
    %s12 = sphi 0, %s16
    %p13 = scmp.ge.s32.totalorder %s12, 4
    %s22 = sphi 0, %s24
    %s25 = sphi 0, %s22
    %s26 = sphi 0, %s25
    %s42 = sphi 0, %s26
    %s46 = sphi 0, %s46
    %s48 = sphi 0, %s46
    %s49 = sphi 0, %s48
    %s63 = sphi 0, %s49
    %s67 = sphi 0, %s67
    %s69 = sphi 0, %s67
    %s70 = sphi 0, %s69
    %s84 = sphi 0, %s70
    %s88 = sphi 0, %s88
    %s90 = sphi 0, %s88
    %s91 = sphi 0, %s90
    %s105 = sphi 0, %s91
    %s109 = sphi 0, %s109
    %s111 = sphi 0, %s109
    %s112 = sphi 0, %s111
    %s126 = sphi 0, %s112
    %s130 = sphi 0, %s130
    %s132 = sphi 0, %s130
    %s133 = sphi 0, %s132
    %s147 = sphi 0, %s133
    %s153 = sphi 0, %s155
    %s156 = sphi 0, %s153
    %s157 = sphi 0, %s156
    %s173 = sphi 0, %s157
  $region4: #{_lambda_.1} parent=0 // loop_header_branch
    %15 = sbr.rel (%p13) target = $region8
  $region5: #{_lambda_.1} parent=0 // loop_body
    %s17 = ssub.s32 %s12, 1
    %s18 = ssub.s32 %s12, 2
    %s19 = sadd.s32 %s12, 1
    %s20 = ssub.s32 %s12, %s19
    %p21 = scmp.eq.s32.totalorder %s20, 0
    %s23 = sadd.s32 %s22, 1
    %s24 = scalar_select %p21, %s22, %s23
    %p27 = pneg %p21
    %p28 = scmp.eq.s32.totalorder %s12, 1
    %p29 = por %p27, %p28
    %p30 = scmp.ne.s32.totalorder %s22, %s25
    %p31 = scmp.eq.s32.totalorder %s12, 0
    %p32 = por %p30, %p31
    %p33 = scmp.ne.s32.totalorder %s22, %s25
    %p34 = scmp.eq.s32.totalorder %s17, 1
    %p35 = por %p33, %p34
    %p36 = scmp.ne.s32.totalorder %s25, %s26
    %p37 = scmp.eq.s32.totalorder %s17, 0
    %p38 = por %p36, %p37
    %p39 = scmp.ne.s32.totalorder %s25, %s26
    %p40 = scmp.eq.s32.totalorder %s18, 1
    %p41 = por %p39, %p40
    %p43 = scmp.ne.s32.totalorder %s26, %s42
    %p44 = scmp.eq.s32.totalorder %s18, 0
    %p45 = por %p43, %p44
    %s47 = sadd.s32 %s46, 1
    %p50 = scmp.eq.s32.totalorder %s12, 1
    %p51 = scmp.ne.s32.totalorder %s46, %s48
    %p52 = scmp.eq.s32.totalorder %s12, 0
    %p53 = por %p51, %p52
    %p54 = scmp.ne.s32.totalorder %s46, %s48
    %p55 = scmp.eq.s32.totalorder %s17, 1
    %p56 = por %p54, %p55
    %p57 = scmp.ne.s32.totalorder %s48, %s49
    %p58 = scmp.eq.s32.totalorder %s17, 0
    %p59 = por %p57, %p58
    %p60 = scmp.ne.s32.totalorder %s48, %s49
    %p61 = scmp.eq.s32.totalorder %s18, 1
    %p62 = por %p60, %p61
    %p64 = scmp.ne.s32.totalorder %s49, %s63
    %p65 = scmp.eq.s32.totalorder %s18, 0
    %p66 = por %p64, %p65
    %s68 = sadd.s32 %s67, 1
    %p71 = scmp.eq.s32.totalorder %s12, 1
    %p72 = scmp.ne.s32.totalorder %s67, %s69
    %p73 = scmp.eq.s32.totalorder %s12, 0
    %p74 = por %p72, %p73
    %p75 = scmp.ne.s32.totalorder %s67, %s69
    %p76 = scmp.eq.s32.totalorder %s17, 1
    %p77 = por %p75, %p76
    %p78 = scmp.ne.s32.totalorder %s69, %s70
    %p79 = scmp.eq.s32.totalorder %s17, 0
    %p80 = por %p78, %p79
    %p81 = scmp.ne.s32.totalorder %s69, %s70
    %p82 = scmp.eq.s32.totalorder %s18, 1
    %p83 = por %p81, %p82
    %p85 = scmp.ne.s32.totalorder %s70, %s84
    %p86 = scmp.eq.s32.totalorder %s18, 0
    %p87 = por %p85, %p86
    %s89 = sadd.s32 %s88, 1
    %p92 = scmp.eq.s32.totalorder %s12, 1
    %p93 = scmp.ne.s32.totalorder %s88, %s90
    %p94 = scmp.eq.s32.totalorder %s12, 0
    %p95 = por %p93, %p94
    %p96 = scmp.ne.s32.totalorder %s88, %s90
    %p97 = scmp.eq.s32.totalorder %s17, 1
    %p98 = por %p96, %p97
    %p99 = scmp.ne.s32.totalorder %s90, %s91
    %p100 = scmp.eq.s32.totalorder %s17, 0
    %p101 = por %p99, %p100
    %p102 = scmp.ne.s32.totalorder %s90, %s91
    %p103 = scmp.eq.s32.totalorder %s18, 1
    %p104 = por %p102, %p103
    %p106 = scmp.ne.s32.totalorder %s91, %s105
    %p107 = scmp.eq.s32.totalorder %s18, 0
    %p108 = por %p106, %p107
    %s110 = sadd.s32 %s109, 1
    %p113 = scmp.eq.s32.totalorder %s12, 1
    %p114 = scmp.ne.s32.totalorder %s109, %s111
    %p115 = scmp.eq.s32.totalorder %s12, 0
    %p116 = por %p114, %p115
    %p117 = scmp.ne.s32.totalorder %s109, %s111
    %p118 = scmp.eq.s32.totalorder %s17, 1
    %p119 = por %p117, %p118
    %p120 = scmp.ne.s32.totalorder %s111, %s112
    %p121 = scmp.eq.s32.totalorder %s17, 0
    %p122 = por %p120, %p121
    %p123 = scmp.ne.s32.totalorder %s111, %s112
    %p124 = scmp.eq.s32.totalorder %s18, 1
    %p125 = por %p123, %p124
    %p127 = scmp.ne.s32.totalorder %s112, %s126
    %p128 = scmp.eq.s32.totalorder %s18, 0
    %p129 = por %p127, %p128
    %s131 = sadd.s32 %s130, 1
    %p134 = scmp.eq.s32.totalorder %s12, 1
    %p135 = scmp.ne.s32.totalorder %s130, %s132
    %p136 = scmp.eq.s32.totalorder %s12, 0
    %p137 = por %p135, %p136
    %p138 = scmp.ne.s32.totalorder %s130, %s132
    %p139 = scmp.eq.s32.totalorder %s17, 1
    %p140 = por %p138, %p139
    %p141 = scmp.ne.s32.totalorder %s132, %s133
    %p142 = scmp.eq.s32.totalorder %s17, 0
    %p143 = por %p141, %p142
    %p144 = scmp.ne.s32.totalorder %s132, %s133
    %p145 = scmp.eq.s32.totalorder %s18, 1
    %p146 = por %p144, %p145
    %p148 = scmp.ne.s32.totalorder %s133, %s147
    %p149 = scmp.eq.s32.totalorder %s18, 0
    %p150 = por %p148, %p149
    %s151 = ssub.s32 %s12, %s19
    %p152 = scmp.eq.s32.totalorder %s151, 0
    %s154 = sadd.s32 %s153, 1
    %s155 = scalar_select %p152, %s153, %s154
    %p158 = pneg %p152
    %p159 = scmp.eq.s32.totalorder %s12, 1
    %p160 = por %p158, %p159
    %p161 = scmp.ne.s32.totalorder %s153, %s156
    %p162 = scmp.eq.s32.totalorder %s12, 0
    %p163 = por %p161, %p162
    %p164 = scmp.ne.s32.totalorder %s153, %s156
    %p165 = scmp.eq.s32.totalorder %s17, 1
    %p166 = por %p164, %p165
    %p167 = scmp.ne.s32.totalorder %s156, %s157
    %p168 = scmp.eq.s32.totalorder %s17, 0
    %p169 = por %p167, %p168
    %p170 = scmp.ne.s32.totalorder %s156, %s157
    %p171 = scmp.eq.s32.totalorder %s18, 1
    %p172 = por %p170, %p171
    %p174 = scmp.ne.s32.totalorder %s157, %s173
    %p175 = scmp.eq.s32.totalorder %s18, 0
    %p176 = por %p174, %p175
    %p177 = scmp.le.s32.totalorder 1, %s12
    %p178 = scmp.lt.s32.totalorder %s12, 3
    %p179 = pnand %p177, %p178
    %p180 = pneg %p179
    // Predicated region
    $region9: #{_lambda_.1} parent=5 // pred_check
      _
    $region10: #{_lambda_.1} parent=5 // pred_check_branch
      %182 = sbr.rel (%p179) target = $region12
    $region11: #{_lambda_.1} parent=5 // pred_region
      %s183 = ssub.s32 %s12, 1
      // Predicated region
      $region13: #{_lambda_.1} parent=11 // pred_check
        %p184 = pneg %p59
      $region14: #{_lambda_.1} parent=11 // pred_check_branch
        %186 = sbr.rel (%p184) target = $region16
      $region15: #{_lambda_.1} parent=11 // pred_region
        _
      $region16: #{_lambda_.1} parent=11 // pred_fallthru
        _
      // Predicated region
      $region17: #{_lambda_.1} parent=11 // pred_check
        %p187 = pneg %p80
      $region18: #{_lambda_.1} parent=11 // pred_check_branch
        %189 = sbr.rel (%p187) target = $region20
      $region19: #{_lambda_.1} parent=11 // pred_region
        _
      $region20: #{_lambda_.1} parent=11 // pred_fallthru
        _
      // Predicated region
      $region21: #{_lambda_.1} parent=11 // pred_check
        %p190 = pneg %p101
      $region22: #{_lambda_.1} parent=11 // pred_check_branch
        %192 = sbr.rel (%p190) target = $region24
      $region23: #{_lambda_.1} parent=11 // pred_region
        _
      $region24: #{_lambda_.1} parent=11 // pred_fallthru
        _
      // Predicated region
      $region25: #{_lambda_.1} parent=11 // pred_check
        %p193 = pneg %p122
      $region26: #{_lambda_.1} parent=11 // pred_check_branch
        %195 = sbr.rel (%p193) target = $region28
      $region27: #{_lambda_.1} parent=11 // pred_region
        _
      $region28: #{_lambda_.1} parent=11 // pred_fallthru
        _
      // Predicated region
      $region29: #{_lambda_.1} parent=11 // pred_check
        %p196 = pneg %p143
      $region30: #{_lambda_.1} parent=11 // pred_check_branch
        %198 = sbr.rel (%p196) target = $region32
      $region31: #{_lambda_.1} parent=11 // pred_region
        _
      $region32: #{_lambda_.1} parent=11 // pred_fallthru
        _
    $region12: #{_lambda_.1} parent=5 // pred_fallthru
      _
    %p199 = scmp.lt.s32.totalorder %s12, 2
    // Predicated region
    $region33: #{_lambda_.1} parent=5 // pred_check
      %p200 = pneg %p199
    $region34: #{_lambda_.1} parent=5 // pred_check_branch
      %202 = sbr.rel (%p200) target = $region36
    $region35: #{_lambda_.1} parent=5 // pred_region
      // Predicated region
      $region37: #{_lambda_.1} parent=35 // pred_check
        %p203 = pneg %p32
      $region38: #{_lambda_.1} parent=35 // pred_check_branch
        %205 = sbr.rel (%p203) target = $region40
      $region39: #{_lambda_.1} parent=35 // pred_region
        %p206 = scmp.lt.s32.totalorder %s12, 1
        %s207 = scalar_select %p206, %s12, 1
        %s208 = smul.addr %s207, 4
        %s209 = smul.addr %s208, 4
        %s210 = scalar_lea.vmem %s0, %s209
      $region40: #{_lambda_.1} parent=35 // pred_fallthru
        _
    $region36: #{_lambda_.1} parent=5 // pred_fallthru
      _
    %p211 = scmp.le.s32.totalorder 1, %s12
    %p212 = scmp.lt.s32.totalorder %s12, 3
    %p213 = pnand %p211, %p212
    %p214 = pneg %p213
    // Predicated region
    $region41: #{_lambda_.1} parent=5 // pred_check
      _
    $region42: #{_lambda_.1} parent=5 // pred_check_branch
      %216 = sbr.rel (%p213) target = $region44
    $region43: #{_lambda_.1} parent=5 // pred_region
      %s217 = ssub.s32 %s12, 1
      %p218 = scmp.lt.s32.totalorder %s17, 1
      %s219 = scalar_select %p218, %s17, 1
      %s220 = smul.addr %s219, 4
      %s221 = smul.addr %s220, 4
      %s222 = scalar_lea.vmem %s0, %s221
      %p223 = pneg %p38
      %p224 = pneg %p35
      %p225 = pneg %p59
      %p226 = pneg %p56
      %p227 = pneg %p80
      %p228 = pneg %p77
      %p229 = pneg %p101
      %p230 = pneg %p98
      %p231 = pneg %p122
      %p232 = pneg %p119
      %p233 = pneg %p143
      %p234 = pneg %p140
      %p235 = pneg %p169
      %p236 = pneg %p166
      %p237 = scmp.lt.s32.totalorder %s17, 1
      %s238 = scalar_select %p237, %s17, 1
      %s239 = smul.addr %s238, 4
      %s240 = smul.addr %s239, 8
      %s241 = scalar_lea.vmem %s6, %s240
      %p242 = scmp.lt.s32.totalorder %s17, 1
      %s243 = scalar_select %p242, %s17, 1
      %s244 = smul.addr %s243, 4
      %s245 = smul.addr %s244, 4
      %s246 = scalar_lea.vmem %s0, %s245
      %p247 = scmp.lt.s32.totalorder %s17, 1
      %s248 = scalar_select %p247, %s17, 1
      %s249 = smul.addr %s248, 4
      %s250 = smul.addr %s249, 8
      %s251 = scalar_lea.vmem %s6, %s250
      %v252 = vld [vmem:[%s246] sm:$0xff]
      %v253 = vld [vmem:[%s246 + $0x8] sm:$0xff]
      %v256 = vcombine.high %v252, %v252
      %v257 = vcombine.high %v253, %v253
      %260 = vrot.lane.b32.xlu0 %v252, 42
      %v261 = vpop.permute.xlu0 %260
      %262 = vrot.lane.b32.xlu0 %v256, 42
      %v263 = vpop.permute.xlu0 %262
      %264 = vrot.lane.b32.xlu0 %v253, 42
      %v265 = vpop.permute.xlu0 %264
      %266 = vrot.lane.b32.xlu0 %v257, 42
      %v267 = vpop.permute.xlu0 %266
      %v268 = vlaneseq
      %v269 = vand.u32 %v268, 127
      %vm270 = vcmp.lt.s32.totalorder %v269, 42
      %v271 = vsel %vm270, %v265, %v267
      %v272 = vsel %vm270, %v263, %v265
      %v273 = vsel %vm270, %v261, %v263
      %v274 = vsel %vm270, %v267, %v261
      %275 = vst [vmem:[#allocation2] sm:$0xf] %v274
      %276 = vst [vmem:[#allocation2 + $0x8] sm:$0xf] %v273
      %277 = vst [vmem:[#allocation2 + $0x10] sm:$0xf] %v272
      %278 = vst [vmem:[#allocation2 + $0x18] sm:$0xf] %v271
      %279 = vrot.lane.b32.xlu0 %v252, 40
      %v280 = vpop.permute.xlu0 %279
      %281 = vrot.lane.b32.xlu0 %v256, 40
      %v282 = vpop.permute.xlu0 %281
      %283 = vrot.lane.b32.xlu0 %v253, 40
      %v284 = vpop.permute.xlu0 %283
      %285 = vrot.lane.b32.xlu0 %v257, 40
      %v286 = vpop.permute.xlu0 %285
      %vm287 = vcmp.lt.s32.totalorder %v269, 40
      %v288 = vsel %vm287, %v284, %v286
      %v289 = vsel %vm287, %v282, %v284
      %v290 = vsel %vm287, %v280, %v282
      %v291 = vsel %vm287, %v286, %v280
      %v296 = vrot.slane %v291, 4
      %v297 = vrot.slane %v290, 4
      %v298 = vrot.slane %v289, 4
      %v299 = vrot.slane %v288, 4
      %304 = vst [vmem:[#allocation2] sm:$0xf0] %v296
      %305 = vst [vmem:[#allocation2 + $0x8] sm:$0xf0] %v297
      %306 = vst [vmem:[#allocation2 + $0x10] sm:$0xf0] %v298
      %307 = vst [vmem:[#allocation2 + $0x18] sm:$0xf0] %v299
      %308 = vrot.lane.b32.xlu0 %v252, 38
      %v309 = vpop.permute.xlu0 %308
      %310 = vrot.lane.b32.xlu0 %v256, 38
      %v311 = vpop.permute.xlu0 %310
      %312 = vrot.lane.b32.xlu0 %v253, 38
      %v313 = vpop.permute.xlu0 %312
      %314 = vrot.lane.b32.xlu0 %v257, 38
      %v315 = vpop.permute.xlu0 %314
      %vm316 = vcmp.lt.s32.totalorder %v269, 38
      %v317 = vsel %vm316, %v313, %v315
      %v318 = vsel %vm316, %v311, %v313
      %v319 = vsel %vm316, %v309, %v311
      %v320 = vsel %vm316, %v315, %v309
      %321 = vst [vmem:[#allocation2 + $0x20] sm:$0xf] %v320
      %322 = vst [vmem:[#allocation2 + $0x28] sm:$0xf] %v319
      %323 = vst [vmem:[#allocation2 + $0x30] sm:$0xf] %v318
      %324 = vst [vmem:[#allocation2 + $0x38] sm:$0xf] %v317
      %325 = vrot.lane.b32.xlu0 %v252, 2
      %v326 = vpop.permute.xlu0 %325
      %327 = vrot.lane.b32.xlu0 %v256, 2
      %v328 = vpop.permute.xlu0 %327
      %329 = vrot.lane.b32.xlu0 %v253, 2
      %v330 = vpop.permute.xlu0 %329
      %331 = vrot.lane.b32.xlu0 %v257, 2
      %v332 = vpop.permute.xlu0 %331
      %vm333 = vcmp.lt.s32.totalorder %v269, 2
      %v334 = vsel %vm333, %v330, %v332
      %v335 = vsel %vm333, %v328, %v330
      %v336 = vsel %vm333, %v326, %v328
      %v337 = vsel %vm333, %v332, %v326
      %v342 = vrot.slane %v337, 4
      %v343 = vrot.slane %v336, 4
      %v344 = vrot.slane %v335, 4
      %v345 = vrot.slane %v334, 4
      %350 = vst [vmem:[#allocation2 + $0x20] sm:$0xf0] %v342
      %351 = vst [vmem:[#allocation2 + $0x28] sm:$0xf0] %v343
      %352 = vst [vmem:[#allocation2 + $0x30] sm:$0xf0] %v344
      %353 = vst [vmem:[#allocation2 + $0x38] sm:$0xf0] %v345
      %354 = vst [vmem:[#allocation2 + $0x40] sm:$0xf] %v252
      %355 = vst [vmem:[#allocation2 + $0x48] sm:$0xf] %v256
      %356 = vst [vmem:[#allocation2 + $0x50] sm:$0xf] %v253
      %357 = vst [vmem:[#allocation2 + $0x58] sm:$0xf] %v257
      %358 = vrot.lane.b32.xlu0 %v252, 126
      %v359 = vpop.permute.xlu0 %358
      %360 = vrot.lane.b32.xlu0 %v256, 126
      %v361 = vpop.permute.xlu0 %360
      %362 = vrot.lane.b32.xlu0 %v253, 126
      %v363 = vpop.permute.xlu0 %362
      %364 = vrot.lane.b32.xlu0 %v257, 126
      %v365 = vpop.permute.xlu0 %364
      %vm366 = vcmp.lt.s32.totalorder %v269, 126
      %v367 = vsel %vm366, %v363, %v365
      %v368 = vsel %vm366, %v361, %v363
      %v369 = vsel %vm366, %v359, %v361
      %v370 = vsel %vm366, %v365, %v359
      %v375 = vrot.slane %v369, 4
      %v376 = vrot.slane %v368, 4
      %v377 = vrot.slane %v367, 4
      %v378 = vrot.slane %v370, 4
      %383 = vst [vmem:[#allocation2 + $0x40] sm:$0xf0] %v375
      %384 = vst [vmem:[#allocation2 + $0x48] sm:$0xf0] %v376
      %385 = vst [vmem:[#allocation2 + $0x50] sm:$0xf0] %v377
      %386 = vst [vmem:[#allocation2 + $0x58] sm:$0xf0] %v378
      %387 = vrot.lane.b32.xlu0 %v252, 90
      %v388 = vpop.permute.xlu0 %387
      %389 = vrot.lane.b32.xlu0 %v256, 90
      %v390 = vpop.permute.xlu0 %389
      %391 = vrot.lane.b32.xlu0 %v253, 90
      %v392 = vpop.permute.xlu0 %391
      %393 = vrot.lane.b32.xlu0 %v257, 90
      %v394 = vpop.permute.xlu0 %393
      %vm395 = vcmp.lt.s32.totalorder %v269, 90
      %v396 = vsel %vm395, %v392, %v394
      %v397 = vsel %vm395, %v390, %v392
      %v398 = vsel %vm395, %v388, %v390
      %v399 = vsel %vm395, %v394, %v388
      %400 = vst [vmem:[#allocation2 + $0x60] sm:$0xf] %v398
      %401 = vst [vmem:[#allocation2 + $0x68] sm:$0xf] %v397
      %402 = vst [vmem:[#allocation2 + $0x70] sm:$0xf] %v396
      %403 = vst [vmem:[#allocation2 + $0x78] sm:$0xf] %v399
      %404 = vrot.lane.b32.xlu0 %v252, 88
      %v405 = vpop.permute.xlu0 %404
      %406 = vrot.lane.b32.xlu0 %v256, 88
      %v407 = vpop.permute.xlu0 %406
      %408 = vrot.lane.b32.xlu0 %v253, 88
      %v409 = vpop.permute.xlu0 %408
      %410 = vrot.lane.b32.xlu0 %v257, 88
      %v411 = vpop.permute.xlu0 %410
      %vm412 = vcmp.lt.s32.totalorder %v269, 88
      %v413 = vsel %vm412, %v409, %v411
      %v414 = vsel %vm412, %v407, %v409
      %v415 = vsel %vm412, %v405, %v407
      %v416 = vsel %vm412, %v411, %v405
      %v421 = vrot.slane %v415, 4
      %v422 = vrot.slane %v414, 4
      %v423 = vrot.slane %v413, 4
      %v424 = vrot.slane %v416, 4
      %429 = vst [vmem:[#allocation2 + $0x60] sm:$0xf0] %v421
      %430 = vst [vmem:[#allocation2 + $0x68] sm:$0xf0] %v422
      %431 = vst [vmem:[#allocation2 + $0x70] sm:$0xf0] %v423
      %432 = vst [vmem:[#allocation2 + $0x78] sm:$0xf0] %v424
      %433 = vrot.lane.b32.xlu0 %v252, 86
      %v434 = vpop.permute.xlu0 %433
      %435 = vrot.lane.b32.xlu0 %v256, 86
      %v436 = vpop.permute.xlu0 %435
      %437 = vrot.lane.b32.xlu0 %v253, 86
      %v438 = vpop.permute.xlu0 %437
      %439 = vrot.lane.b32.xlu0 %v257, 86
      %v440 = vpop.permute.xlu0 %439
      %vm441 = vcmp.lt.s32.totalorder %v269, 86
      %v442 = vsel %vm441, %v438, %v440
      %v443 = vsel %vm441, %v436, %v438
      %v444 = vsel %vm441, %v434, %v436
      %v445 = vsel %vm441, %v440, %v434
      %446 = vst [vmem:[#allocation2 + $0x80] sm:$0xf] %v444
      %447 = vst [vmem:[#allocation2 + $0x88] sm:$0xf] %v443
      %448 = vst [vmem:[#allocation2 + $0x90] sm:$0xf] %v442
      %449 = vst [vmem:[#allocation2 + $0x98] sm:$0xf] %v445
      %v450 = vld [vmem:[%s2] sm:$0xff]
      %v451 = vld [vmem:[%s2 + $0x8] sm:$0xff]
      %v452 = vld [vmem:[#allocation2] sm:$0xff]
      %v453 = vld [vmem:[#allocation2 + $0x8] sm:$0xff]
      %v454 = vld [vmem:[#allocation2 + $0x10] sm:$0xff]
      %v455 = vld [vmem:[#allocation2 + $0x18] sm:$0xff]
      %v456 = vld [vmem:[#allocation2 + $0x20] sm:$0xff]
      %v457 = vld [vmem:[#allocation2 + $0x28] sm:$0xff]
      %v458 = vld [vmem:[#allocation2 + $0x30] sm:$0xff]
      %v459 = vld [vmem:[#allocation2 + $0x38] sm:$0xff]
      %v460 = vld [vmem:[#allocation2 + $0x40] sm:$0xff]
      %v461 = vld [vmem:[#allocation2 + $0x48] sm:$0xff]
      %v462 = vld [vmem:[#allocation2 + $0x50] sm:$0xff]
      %v463 = vld [vmem:[#allocation2 + $0x58] sm:$0xff]
      %v464 = vld [vmem:[#allocation2 + $0x60] sm:$0xff]
      %v465 = vld [vmem:[#allocation2 + $0x68] sm:$0xff]
      %v466 = vld [vmem:[#allocation2 + $0x70] sm:$0xff]
      %v467 = vld [vmem:[#allocation2 + $0x78] sm:$0xff]
      %v468 = vld [vmem:[#allocation2 + $0x80] sm:$0xf]
      %v469 = vld [vmem:[#allocation2 + $0x88] sm:$0xf]
      %v470 = vld [vmem:[#allocation2 + $0x90] sm:$0xf]
      %v471 = vld [vmem:[#allocation2 + $0x98] sm:$0xf]
      %v472 = vld [vmem:[%s3] sm:$0xff]
      %v473 = vld [vmem:[%s3 + $0x8] sm:$0xff]
      %475 = vset.pattern.permute.xlu0 0
      %476 = vperm.xlu0 %475, %v472
      %v477 = vpop.permute.xlu0 %476
      %480 = vset.pattern.permute.xlu0 0
      %481 = vperm.xlu0 %480, %v473
      %v482 = vpop.permute.xlu0 %481
      %vm484 = vcmask 293888
      %v486 = vsel %vm484, %v450, 0
      %v489 = vsel %vm484, %v451, 0
      %vm491 = vcmask 1043456
      %v493 = vsel %vm491, %v468, 0
      %v496 = vsel %vm491, %v469, 0
      %v499 = vsel %vm491, %v470, 0
      %v502 = vsel %vm491, %v471, 0
      %504 = vmatprep.subr.mxu0 0.0
      %505 = vmatpush1.msra.mxu0 0.0
      %506 = vmatprep.subr.mxu0 0.0
      %507 = vmatpush1.msra.mxu0 0.0
      %508 = vmatprep.subr.mxu0 0.0
      %509 = vmatpush1.msra.mxu0 0.0
      %510 = vmatprep.subr.mxu0 0.0
      %511 = vmatpush1.msra.mxu0 0.0
      %512 = vmatprep.subr.mxu0 0.0
      %513 = vmatpush1.msra.mxu0 0.0
      %514 = vmatprep.subr.mxu0 0.0
      %515 = vmatpush1.msra.mxu0 0.0
      %516 = vmatprep.subr.mxu0 0.0
      %517 = vmatpush1.msra.mxu0 0.0
      %518 = vmatprep.subr.mxu0 0.0
      %519 = vmatpush1.msra.mxu0 0.0
      %520 = vmatprep.subr.mxu0 0.0
      %521 = vmatpush1.msra.mxu0 0.0
      %522 = vmatprep.subr.mxu0 0.0
      %523 = vmatpush1.msra.mxu0 0.0
      %524 = vmatprep.subr.mxu0 0.0
      %525 = vmatpush1.msra.mxu0 0.0
      %526 = vmatprep.subr.mxu0 %v496
      %527 = vmatpush1.msra.mxu0 %v493
      %528 = vmatprep.subr.mxu0 %v465
      %529 = vmatpush1.msra.mxu0 %v464
      %530 = vmatprep.subr.mxu0 %v461
      %531 = vmatpush1.msra.mxu0 %v460
      %532 = vmatprep.subr.mxu0 %v457
      %533 = vmatpush1.msra.mxu0 %v456
      %534 = vmatprep.subr.mxu0 %v453
      %535 = vmatpush1.msra.mxu0 %v452
      %536 = vmatprep.subr.mxu0 0.0
      %537 = vmatpush2.msra.mxu0 0.0
      %538 = vmatprep.subr.mxu0 0.0
      %539 = vmatpush2.msra.mxu0 0.0
      %540 = vmatprep.subr.mxu0 0.0
      %541 = vmatpush2.msra.mxu0 0.0
      %542 = vmatprep.subr.mxu0 0.0
      %543 = vmatpush2.msra.mxu0 0.0
      %544 = vmatprep.subr.mxu0 0.0
      %545 = vmatpush2.msra.mxu0 0.0
      %546 = vmatprep.subr.mxu0 0.0
      %547 = vmatpush2.msra.mxu0 0.0
      %548 = vmatprep.subr.mxu0 0.0
      %549 = vmatpush2.msra.mxu0 0.0
      %550 = vmatprep.subr.mxu0 0.0
      %551 = vmatpush2.msra.mxu0 0.0
      %552 = vmatprep.subr.mxu0 0.0
      %553 = vmatpush2.msra.mxu0 0.0
      %554 = vmatprep.subr.mxu0 0.0
      %555 = vmatpush2.msra.mxu0 0.0
      %556 = vmatprep.subr.mxu0 0.0
      %557 = vmatpush2.msra.mxu0 0.0
      %558 = vmatprep.subr.mxu0 0.0
      %559 = vmatpush2.msra.mxu0 0.0
      %560 = vmatprep.subr.mxu0 0.0
      %561 = vmatpush2.msra.mxu0 0.0
      %562 = vmatprep.subr.mxu0 0.0
      %563 = vmatpush2.msra.mxu0 0.0
      %564 = vmatprep.subr.mxu0 0.0
      %565 = vmatpush2.msra.mxu0 0.0
      %566 = vmatprep.subr.mxu0 0.0
      %567 = vmatpush2.msra.mxu0 0.0
      %568 = vmatprep.mubr.f32.mxu0 0.0
      %569 = vmatmul.mubr.f32.gmra.mxu0 %v486
      %v570 = vpop.f32.mrf.mxu0
      %v571 = vadd.f32 %v477, %v570
      %v572 = vpop.f32.mrf.mxu0
      %v573 = vadd.f32 %v477, %v572
      %574 = vmatprep.mubr.f32.mxu0 0.0
      %575 = vmatmul.mubr.f32.gmra.mxu0 %v489
      %v576 = vpop.f32.mrf.mxu0
      %v577 = vadd.f32 %v482, %v576
      %v578 = vpop.f32.mrf.mxu0
      %v579 = vadd.f32 %v482, %v578
      %580 = vdwg.mxu0
      %581 = vmatprep.subr.mxu0 0.0
      %582 = vmatpush1.msra.mxu0 0.0
      %583 = vmatprep.subr.mxu0 0.0
      %584 = vmatpush1.msra.mxu0 0.0
      %585 = vmatprep.subr.mxu0 0.0
      %586 = vmatpush1.msra.mxu0 0.0
      %587 = vmatprep.subr.mxu0 0.0
      %588 = vmatpush1.msra.mxu0 0.0
      %589 = vmatprep.subr.mxu0 0.0
      %590 = vmatpush1.msra.mxu0 0.0
      %591 = vmatprep.subr.mxu0 0.0
      %592 = vmatpush1.msra.mxu0 0.0
      %593 = vmatprep.subr.mxu0 0.0
      %594 = vmatpush1.msra.mxu0 0.0
      %595 = vmatprep.subr.mxu0 0.0
      %596 = vmatpush1.msra.mxu0 0.0
      %597 = vmatprep.subr.mxu0 0.0
      %598 = vmatpush1.msra.mxu0 0.0
      %599 = vmatprep.subr.mxu0 0.0
      %600 = vmatpush1.msra.mxu0 0.0
      %601 = vmatprep.subr.mxu0 0.0
      %602 = vmatpush1.msra.mxu0 0.0
      %603 = vmatprep.subr.mxu0 %v502
      %604 = vmatpush1.msra.mxu0 %v499
      %605 = vmatprep.subr.mxu0 %v467
      %606 = vmatpush1.msra.mxu0 %v466
      %607 = vmatprep.subr.mxu0 %v463
      %608 = vmatpush1.msra.mxu0 %v462
      %609 = vmatprep.subr.mxu0 %v459
      %610 = vmatpush1.msra.mxu0 %v458
      %611 = vmatprep.subr.mxu0 %v455
      %612 = vmatpush1.msra.mxu0 %v454
      %613 = vmatprep.subr.mxu0 0.0
      %614 = vmatpush2.msra.mxu0 0.0
      %615 = vmatprep.subr.mxu0 0.0
      %616 = vmatpush2.msra.mxu0 0.0
      %617 = vmatprep.subr.mxu0 0.0
      %618 = vmatpush2.msra.mxu0 0.0
      %619 = vmatprep.subr.mxu0 0.0
      %620 = vmatpush2.msra.mxu0 0.0
      %621 = vmatprep.subr.mxu0 0.0
      %622 = vmatpush2.msra.mxu0 0.0
      %623 = vmatprep.subr.mxu0 0.0
      %624 = vmatpush2.msra.mxu0 0.0
      %625 = vmatprep.subr.mxu0 0.0
      %626 = vmatpush2.msra.mxu0 0.0
      %627 = vmatprep.subr.mxu0 0.0
      %628 = vmatpush2.msra.mxu0 0.0
      %629 = vmatprep.subr.mxu0 0.0
      %630 = vmatpush2.msra.mxu0 0.0
      %631 = vmatprep.subr.mxu0 0.0
      %632 = vmatpush2.msra.mxu0 0.0
      %633 = vmatprep.subr.mxu0 0.0
      %634 = vmatpush2.msra.mxu0 0.0
      %635 = vmatprep.subr.mxu0 0.0
      %636 = vmatpush2.msra.mxu0 0.0
      %637 = vmatprep.subr.mxu0 0.0
      %638 = vmatpush2.msra.mxu0 0.0
      %639 = vmatprep.subr.mxu0 0.0
      %640 = vmatpush2.msra.mxu0 0.0
      %641 = vmatprep.subr.mxu0 0.0
      %642 = vmatpush2.msra.mxu0 0.0
      %643 = vmatprep.subr.mxu0 0.0
      %644 = vmatpush2.msra.mxu0 0.0
      %645 = vmatprep.mubr.f32.mxu0 0.0
      %646 = vmatmul.mubr.f32.gmra.mxu0 %v486
      %v647 = vpop.f32.mrf.mxu0
      %v648 = vadd.f32 %v477, %v647
      %v649 = vpop.f32.mrf.mxu0
      %v650 = vadd.f32 %v477, %v649
      %651 = vmatprep.mubr.f32.mxu0 0.0
      %652 = vmatmul.mubr.f32.gmra.mxu0 %v489
      %v653 = vpop.f32.mrf.mxu0
      %v654 = vadd.f32 %v482, %v653
      %v655 = vpop.f32.mrf.mxu0
      %v656 = vadd.f32 %v482, %v655
      %657 = vdwg.mxu0
      %v658 = vld [vmem:[%s1] sm:$0xf]
      %v659 = vmax.f32 %v571, 0.0
      %v660 = vmax.f32 %v573, 0.0
      %v661 = vmax.f32 %v648, 0.0
      %v662 = vmax.f32 %v650, 0.0
      %v663 = vmax.f32 %v577, 0.0
      %v664 = vmax.f32 %v579, 0.0
      %v665 = vmax.f32 %v654, 0.0
      %v666 = vmax.f32 %v656, 0.0
      %v668 = vlaneseq
      %v669 = vshrl.u32 %v668, 7
      %v670 = vsub.s32 0, %v669
      %v671 = vrot.slane %v658, %v670
      %v672 = vlaneseq
      %v673 = vshrl.u32 %v672, 7
      %v674 = vsub.s32 1, %v673
      %v675 = vrot.slane %v658, %v674
      %v676 = vlaneseq
      %v677 = vshrl.u32 %v676, 7
      %v678 = vsub.s32 2, %v677
      %v679 = vrot.slane %v658, %v678
      %v680 = vlaneseq
      %v681 = vshrl.u32 %v680, 7
      %v682 = vsub.s32 3, %v681
      %v683 = vrot.slane %v658, %v682
      %v688 = vmul.f32 %v659, %v671
      %v689 = vmul.f32 %v660, %v675
      %v690 = vmul.f32 %v661, %v679
      %v691 = vmul.f32 %v662, %v683
      %v692 = vmul.f32 %v663, %v671
      %v693 = vmul.f32 %v664, %v675
      %v694 = vmul.f32 %v665, %v679
      %v695 = vmul.f32 %v666, %v683
      %696 = vrot.lane.b32.xlu0 %v688, 42
      %v697 = vpop.permute.xlu0 %696
      %698 = vrot.lane.b32.xlu0 %v692, 42
      %v699 = vpop.permute.xlu0 %698
      %700 = vrot.lane.b32.xlu0 %v689, 42
      %v701 = vpop.permute.xlu0 %700
      %702 = vrot.lane.b32.xlu0 %v693, 42
      %v703 = vpop.permute.xlu0 %702
      %704 = vrot.lane.b32.xlu0 %v690, 42
      %v705 = vpop.permute.xlu0 %704
      %706 = vrot.lane.b32.xlu0 %v694, 42
      %v707 = vpop.permute.xlu0 %706
      %708 = vrot.lane.b32.xlu0 %v691, 42
      %v709 = vpop.permute.xlu0 %708
      %710 = vrot.lane.b32.xlu0 %v695, 42
      %v711 = vpop.permute.xlu0 %710
      %v712 = vsel %vm270, %v705, %v709
      %v713 = vsel %vm270, %v707, %v711
      %v714 = vsel %vm270, %v701, %v705
      %v715 = vsel %vm270, %v703, %v707
      %v716 = vsel %vm270, %v697, %v701
      %v717 = vsel %vm270, %v699, %v703
      %v718 = vsel %vm270, %v709, %v697
      %v719 = vsel %vm270, %v711, %v699
      %720 = vst [vmem:[#allocation2] sm:$0xff] %v718
      %721 = vst [vmem:[#allocation2 + $0x8] sm:$0xff] %v716
      %722 = vst [vmem:[#allocation2 + $0x10] sm:$0xff] %v714
      %723 = vst [vmem:[#allocation2 + $0x18] sm:$0xff] %v712
      %724 = vst [vmem:[#allocation2 + $0x20] sm:$0xff] %v719
      %725 = vst [vmem:[#allocation2 + $0x28] sm:$0xff] %v717
      %726 = vst [vmem:[#allocation2 + $0x30] sm:$0xff] %v715
      %727 = vst [vmem:[#allocation2 + $0x38] sm:$0xff] %v713
      %728 = vrot.lane.b32.xlu0 %v688, 40
      %v729 = vpop.permute.xlu0 %728
      %730 = vrot.lane.b32.xlu0 %v692, 40
      %v731 = vpop.permute.xlu0 %730
      %732 = vrot.lane.b32.xlu0 %v689, 40
      %v733 = vpop.permute.xlu0 %732
      %734 = vrot.lane.b32.xlu0 %v693, 40
      %v735 = vpop.permute.xlu0 %734
      %736 = vrot.lane.b32.xlu0 %v690, 40
      %v737 = vpop.permute.xlu0 %736
      %738 = vrot.lane.b32.xlu0 %v694, 40
      %v739 = vpop.permute.xlu0 %738
      %740 = vrot.lane.b32.xlu0 %v691, 40
      %v741 = vpop.permute.xlu0 %740
      %742 = vrot.lane.b32.xlu0 %v695, 40
      %v743 = vpop.permute.xlu0 %742
      %v744 = vsel %vm287, %v737, %v741
      %v745 = vsel %vm287, %v739, %v743
      %v746 = vsel %vm287, %v733, %v737
      %v747 = vsel %vm287, %v735, %v739
      %v748 = vsel %vm287, %v729, %v733
      %v749 = vsel %vm287, %v731, %v735
      %v750 = vsel %vm287, %v741, %v729
      %v751 = vsel %vm287, %v743, %v731
      %752 = vst [vmem:[#allocation2 + $0x40] sm:$0xff] %v750
      %753 = vst [vmem:[#allocation2 + $0x48] sm:$0xff] %v748
      %754 = vst [vmem:[#allocation2 + $0x50] sm:$0xff] %v746
      %755 = vst [vmem:[#allocation2 + $0x58] sm:$0xff] %v744
      %756 = vst [vmem:[#allocation2 + $0x60] sm:$0xff] %v751
      %757 = vst [vmem:[#allocation2 + $0x68] sm:$0xff] %v749
      %758 = vst [vmem:[#allocation2 + $0x70] sm:$0xff] %v747
      %759 = vst [vmem:[#allocation2 + $0x78] sm:$0xff] %v745
      %760 = vrot.lane.b32.xlu0 %v688, 38
      %v761 = vpop.permute.xlu0 %760
      %762 = vrot.lane.b32.xlu0 %v692, 38
      %v763 = vpop.permute.xlu0 %762
      %764 = vrot.lane.b32.xlu0 %v689, 38
      %v765 = vpop.permute.xlu0 %764
      %766 = vrot.lane.b32.xlu0 %v693, 38
      %v767 = vpop.permute.xlu0 %766
      %768 = vrot.lane.b32.xlu0 %v690, 38
      %v769 = vpop.permute.xlu0 %768
      %770 = vrot.lane.b32.xlu0 %v694, 38
      %v771 = vpop.permute.xlu0 %770
      %772 = vrot.lane.b32.xlu0 %v691, 38
      %v773 = vpop.permute.xlu0 %772
      %774 = vrot.lane.b32.xlu0 %v695, 38
      %v775 = vpop.permute.xlu0 %774
      %v776 = vsel %vm316, %v769, %v773
      %v777 = vsel %vm316, %v771, %v775
      %v778 = vsel %vm316, %v765, %v769
      %v779 = vsel %vm316, %v767, %v771
      %v780 = vsel %vm316, %v761, %v765
      %v781 = vsel %vm316, %v763, %v767
      %v782 = vsel %vm316, %v773, %v761
      %v783 = vsel %vm316, %v775, %v763
      %784 = vst [vmem:[#allocation2 + $0x80] sm:$0xff] %v782
      %785 = vst [vmem:[#allocation2 + $0x88] sm:$0xff] %v780
      %786 = vst [vmem:[#allocation2 + $0x90] sm:$0xff] %v778
      %787 = vst [vmem:[#allocation2 + $0x98] sm:$0xff] %v776
      %788 = vst [vmem:[#allocation2 + $0xa0] sm:$0xff] %v783
      %789 = vst [vmem:[#allocation2 + $0xa8] sm:$0xff] %v781
      %790 = vst [vmem:[#allocation2 + $0xb0] sm:$0xff] %v779
      %791 = vst [vmem:[#allocation2 + $0xb8] sm:$0xff] %v777
      %792 = vrot.lane.b32.xlu0 %v688, 2
      %v793 = vpop.permute.xlu0 %792
      %794 = vrot.lane.b32.xlu0 %v692, 2
      %v795 = vpop.permute.xlu0 %794
      %796 = vrot.lane.b32.xlu0 %v689, 2
      %v797 = vpop.permute.xlu0 %796
      %798 = vrot.lane.b32.xlu0 %v693, 2
      %v799 = vpop.permute.xlu0 %798
      %800 = vrot.lane.b32.xlu0 %v690, 2
      %v801 = vpop.permute.xlu0 %800
      %802 = vrot.lane.b32.xlu0 %v694, 2
      %v803 = vpop.permute.xlu0 %802
      %804 = vrot.lane.b32.xlu0 %v691, 2
      %v805 = vpop.permute.xlu0 %804
      %806 = vrot.lane.b32.xlu0 %v695, 2
      %v807 = vpop.permute.xlu0 %806
      %v808 = vsel %vm333, %v801, %v805
      %v809 = vsel %vm333, %v803, %v807
      %v810 = vsel %vm333, %v797, %v801
      %v811 = vsel %vm333, %v799, %v803
      %v812 = vsel %vm333, %v793, %v797
      %v813 = vsel %vm333, %v795, %v799
      %v814 = vsel %vm333, %v805, %v793
      %v815 = vsel %vm333, %v807, %v795
      %816 = vst [vmem:[#allocation2 + $0xc0] sm:$0xff] %v814
      %817 = vst [vmem:[#allocation2 + $0xc8] sm:$0xff] %v812
      %818 = vst [vmem:[#allocation2 + $0xd0] sm:$0xff] %v810
      %819 = vst [vmem:[#allocation2 + $0xd8] sm:$0xff] %v808
      %820 = vst [vmem:[#allocation2 + $0xe0] sm:$0xff] %v815
      %821 = vst [vmem:[#allocation2 + $0xe8] sm:$0xff] %v813
      %822 = vst [vmem:[#allocation2 + $0xf0] sm:$0xff] %v811
      %823 = vst [vmem:[#allocation2 + $0xf8] sm:$0xff] %v809
      %824 = vst [vmem:[#allocation2 + $0x100] sm:$0xff] %v688
      %825 = vst [vmem:[#allocation2 + $0x108] sm:$0xff] %v689
      %826 = vst [vmem:[#allocation2 + $0x110] sm:$0xff] %v690
      %827 = vst [vmem:[#allocation2 + $0x118] sm:$0xff] %v691
      %828 = vst [vmem:[#allocation2 + $0x120] sm:$0xff] %v692
      %829 = vst [vmem:[#allocation2 + $0x128] sm:$0xff] %v693
      %830 = vst [vmem:[#allocation2 + $0x130] sm:$0xff] %v694
      %831 = vst [vmem:[#allocation2 + $0x138] sm:$0xff] %v695
      %832 = vrot.lane.b32.xlu0 %v688, 126
      %v833 = vpop.permute.xlu0 %832
      %834 = vrot.lane.b32.xlu0 %v692, 126
      %v835 = vpop.permute.xlu0 %834
      %836 = vrot.lane.b32.xlu0 %v689, 126
      %v837 = vpop.permute.xlu0 %836
      %838 = vrot.lane.b32.xlu0 %v693, 126
      %v839 = vpop.permute.xlu0 %838
      %840 = vrot.lane.b32.xlu0 %v690, 126
      %v841 = vpop.permute.xlu0 %840
      %842 = vrot.lane.b32.xlu0 %v694, 126
      %v843 = vpop.permute.xlu0 %842
      %844 = vrot.lane.b32.xlu0 %v691, 126
      %v845 = vpop.permute.xlu0 %844
      %846 = vrot.lane.b32.xlu0 %v695, 126
      %v847 = vpop.permute.xlu0 %846
      %v848 = vsel %vm366, %v841, %v845
      %v849 = vsel %vm366, %v843, %v847
      %v850 = vsel %vm366, %v837, %v841
      %v851 = vsel %vm366, %v839, %v843
      %v852 = vsel %vm366, %v833, %v837
      %v853 = vsel %vm366, %v835, %v839
      %v854 = vsel %vm366, %v845, %v833
      %v855 = vsel %vm366, %v847, %v835
      %856 = vst [vmem:[#allocation2 + $0x140] sm:$0xff] %v852
      %857 = vst [vmem:[#allocation2 + $0x148] sm:$0xff] %v850
      %858 = vst [vmem:[#allocation2 + $0x150] sm:$0xff] %v848
      %859 = vst [vmem:[#allocation2 + $0x158] sm:$0xff] %v854
      %860 = vst [vmem:[#allocation2 + $0x160] sm:$0xff] %v853
      %861 = vst [vmem:[#allocation2 + $0x168] sm:$0xff] %v851
      %862 = vst [vmem:[#allocation2 + $0x170] sm:$0xff] %v849
      %863 = vst [vmem:[#allocation2 + $0x178] sm:$0xff] %v855
      %864 = vrot.lane.b32.xlu0 %v688, 90
      %v865 = vpop.permute.xlu0 %864
      %866 = vrot.lane.b32.xlu0 %v692, 90
      %v867 = vpop.permute.xlu0 %866
      %868 = vrot.lane.b32.xlu0 %v689, 90
      %v869 = vpop.permute.xlu0 %868
      %870 = vrot.lane.b32.xlu0 %v693, 90
      %v871 = vpop.permute.xlu0 %870
      %872 = vrot.lane.b32.xlu0 %v690, 90
      %v873 = vpop.permute.xlu0 %872
      %874 = vrot.lane.b32.xlu0 %v694, 90
      %v875 = vpop.permute.xlu0 %874
      %876 = vrot.lane.b32.xlu0 %v691, 90
      %v877 = vpop.permute.xlu0 %876
      %878 = vrot.lane.b32.xlu0 %v695, 90
      %v879 = vpop.permute.xlu0 %878
      %v880 = vsel %vm395, %v873, %v877
      %v881 = vsel %vm395, %v875, %v879
      %v882 = vsel %vm395, %v869, %v873
      %v883 = vsel %vm395, %v871, %v875
      %v884 = vsel %vm395, %v865, %v869
      %v885 = vsel %vm395, %v867, %v871
      %v886 = vsel %vm395, %v877, %v865
      %v887 = vsel %vm395, %v879, %v867
      %888 = vst [vmem:[#allocation2 + $0x180] sm:$0xff] %v884
      %889 = vst [vmem:[#allocation2 + $0x188] sm:$0xff] %v882
      %890 = vst [vmem:[#allocation2 + $0x190] sm:$0xff] %v880
      %891 = vst [vmem:[#allocation2 + $0x198] sm:$0xff] %v886
      %892 = vst [vmem:[#allocation2 + $0x1a0] sm:$0xff] %v885
      %893 = vst [vmem:[#allocation2 + $0x1a8] sm:$0xff] %v883
      %894 = vst [vmem:[#allocation2 + $0x1b0] sm:$0xff] %v881
      %895 = vst [vmem:[#allocation2 + $0x1b8] sm:$0xff] %v887
      %896 = vrot.lane.b32.xlu0 %v688, 88
      %v897 = vpop.permute.xlu0 %896
      %898 = vrot.lane.b32.xlu0 %v692, 88
      %v899 = vpop.permute.xlu0 %898
      %900 = vrot.lane.b32.xlu0 %v689, 88
      %v901 = vpop.permute.xlu0 %900
      %902 = vrot.lane.b32.xlu0 %v693, 88
      %v903 = vpop.permute.xlu0 %902
      %904 = vrot.lane.b32.xlu0 %v690, 88
      %v905 = vpop.permute.xlu0 %904
      %906 = vrot.lane.b32.xlu0 %v694, 88
      %v907 = vpop.permute.xlu0 %906
      %908 = vrot.lane.b32.xlu0 %v691, 88
      %v909 = vpop.permute.xlu0 %908
      %910 = vrot.lane.b32.xlu0 %v695, 88
      %v911 = vpop.permute.xlu0 %910
      %v912 = vsel %vm412, %v905, %v909
      %v913 = vsel %vm412, %v907, %v911
      %v914 = vsel %vm412, %v901, %v905
      %v915 = vsel %vm412, %v903, %v907
      %v916 = vsel %vm412, %v897, %v901
      %v917 = vsel %vm412, %v899, %v903
      %v918 = vsel %vm412, %v909, %v897
      %v919 = vsel %vm412, %v911, %v899
      %920 = vst [vmem:[#allocation2 + $0x1c0] sm:$0xff] %v916
      %921 = vst [vmem:[#allocation2 + $0x1c8] sm:$0xff] %v914
      %922 = vst [vmem:[#allocation2 + $0x1d0] sm:$0xff] %v912
      %923 = vst [vmem:[#allocation2 + $0x1d8] sm:$0xff] %v918
      %924 = vst [vmem:[#allocation2 + $0x1e0] sm:$0xff] %v917
      %925 = vst [vmem:[#allocation2 + $0x1e8] sm:$0xff] %v915
      %926 = vst [vmem:[#allocation2 + $0x1f0] sm:$0xff] %v913
      %927 = vst [vmem:[#allocation2 + $0x1f8] sm:$0xff] %v919
      %928 = vrot.lane.b32.xlu0 %v688, 86
      %v929 = vpop.permute.xlu0 %928
      %930 = vrot.lane.b32.xlu0 %v692, 86
      %v931 = vpop.permute.xlu0 %930
      %932 = vrot.lane.b32.xlu0 %v689, 86
      %v933 = vpop.permute.xlu0 %932
      %934 = vrot.lane.b32.xlu0 %v693, 86
      %v935 = vpop.permute.xlu0 %934
      %936 = vrot.lane.b32.xlu0 %v690, 86
      %v937 = vpop.permute.xlu0 %936
      %938 = vrot.lane.b32.xlu0 %v694, 86
      %v939 = vpop.permute.xlu0 %938
      %940 = vrot.lane.b32.xlu0 %v691, 86
      %v941 = vpop.permute.xlu0 %940
      %942 = vrot.lane.b32.xlu0 %v695, 86
      %v943 = vpop.permute.xlu0 %942
      %v944 = vsel %vm441, %v937, %v941
      %v945 = vsel %vm441, %v939, %v943
      %v946 = vsel %vm441, %v933, %v937
      %v947 = vsel %vm441, %v935, %v939
      %v948 = vsel %vm441, %v929, %v933
      %v949 = vsel %vm441, %v931, %v935
      %v950 = vsel %vm441, %v941, %v929
      %v951 = vsel %vm441, %v943, %v931
      %952 = vst [vmem:[#allocation2 + $0x200] sm:$0xff] %v948
      %953 = vst [vmem:[#allocation2 + $0x208] sm:$0xff] %v946
      %954 = vst [vmem:[#allocation2 + $0x210] sm:$0xff] %v944
      %955 = vst [vmem:[#allocation2 + $0x218] sm:$0xff] %v950
      %956 = vst [vmem:[#allocation2 + $0x220] sm:$0xff] %v949
      %957 = vst [vmem:[#allocation2 + $0x228] sm:$0xff] %v947
      %958 = vst [vmem:[#allocation2 + $0x230] sm:$0xff] %v945
      %959 = vst [vmem:[#allocation2 + $0x238] sm:$0xff] %v951
      %v960 = vld [vmem:[%s4] sm:$0xff]
      %v961 = vld [vmem:[%s4 + $0x8] sm:$0xff]
      %v962 = vld [vmem:[#allocation2] sm:$0xff]
      %v963 = vld [vmem:[#allocation2 + $0x8] sm:$0xff]
      %v964 = vld [vmem:[#allocation2 + $0x10] sm:$0xff]
      %v965 = vld [vmem:[#allocation2 + $0x18] sm:$0xff]
      %v966 = vld [vmem:[#allocation2 + $0x20] sm:$0xff]
      %v967 = vld [vmem:[#allocation2 + $0x28] sm:$0xff]
      %v968 = vld [vmem:[#allocation2 + $0x30] sm:$0xff]
      %v969 = vld [vmem:[#allocation2 + $0x38] sm:$0xff]
      %v970 = vld [vmem:[#allocation2 + $0x40] sm:$0xff]
      %v971 = vld [vmem:[#allocation2 + $0x48] sm:$0xff]
      %v972 = vld [vmem:[#allocation2 + $0x50] sm:$0xff]
      %v973 = vld [vmem:[#allocation2 + $0x58] sm:$0xff]
      %v974 = vld [vmem:[#allocation2 + $0x60] sm:$0xff]
      %v975 = vld [vmem:[#allocation2 + $0x68] sm:$0xff]
      %v976 = vld [vmem:[#allocation2 + $0x70] sm:$0xff]
      %v977 = vld [vmem:[#allocation2 + $0x78] sm:$0xff]
      %v978 = vld [vmem:[#allocation2 + $0x80] sm:$0xff]
      %v979 = vld [vmem:[#allocation2 + $0x88] sm:$0xff]
      %v980 = vld [vmem:[#allocation2 + $0x90] sm:$0xff]
      %v981 = vld [vmem:[#allocation2 + $0x98] sm:$0xff]
      %v982 = vld [vmem:[#allocation2 + $0xa0] sm:$0xff]
      %v983 = vld [vmem:[#allocation2 + $0xa8] sm:$0xff]
      %v984 = vld [vmem:[#allocation2 + $0xb0] sm:$0xff]
      %v985 = vld [vmem:[#allocation2 + $0xb8] sm:$0xff]
      %v986 = vld [vmem:[#allocation2 + $0xc0] sm:$0xff]
      %v987 = vld [vmem:[#allocation2 + $0xc8] sm:$0xff]
      %v988 = vld [vmem:[#allocation2 + $0xd0] sm:$0xff]
      %v989 = vld [vmem:[#allocation2 + $0xd8] sm:$0xff]
      %v990 = vld [vmem:[#allocation2 + $0xe0] sm:$0xff]
      %v991 = vld [vmem:[#allocation2 + $0xe8] sm:$0xff]
      %v992 = vld [vmem:[#allocation2 + $0xf0] sm:$0xff]
      %v993 = vld [vmem:[#allocation2 + $0xf8] sm:$0xff]
      %v994 = vld [vmem:[#allocation2 + $0x100] sm:$0xff]
      %v995 = vld [vmem:[#allocation2 + $0x108] sm:$0xff]
      %v996 = vld [vmem:[#allocation2 + $0x110] sm:$0xff]
      %v997 = vld [vmem:[#allocation2 + $0x118] sm:$0xff]
      %v998 = vld [vmem:[#allocation2 + $0x120] sm:$0xff]
      %v999 = vld [vmem:[#allocation2 + $0x128] sm:$0xff]
      %v1000 = vld [vmem:[#allocation2 + $0x130] sm:$0xff]
      %v1001 = vld [vmem:[#allocation2 + $0x138] sm:$0xff]
      %v1002 = vld [vmem:[#allocation2 + $0x140] sm:$0xff]
      %v1003 = vld [vmem:[#allocation2 + $0x148] sm:$0xff]
      %v1004 = vld [vmem:[#allocation2 + $0x150] sm:$0xff]
      %v1005 = vld [vmem:[#allocation2 + $0x158] sm:$0xff]
      %v1006 = vld [vmem:[#allocation2 + $0x160] sm:$0xff]
      %v1007 = vld [vmem:[#allocation2 + $0x168] sm:$0xff]
      %v1008 = vld [vmem:[#allocation2 + $0x170] sm:$0xff]
      %v1009 = vld [vmem:[#allocation2 + $0x178] sm:$0xff]
      %v1010 = vld [vmem:[#allocation2 + $0x180] sm:$0xff]
      %v1011 = vld [vmem:[#allocation2 + $0x188] sm:$0xff]
      %v1012 = vld [vmem:[#allocation2 + $0x190] sm:$0xff]
      %v1013 = vld [vmem:[#allocation2 + $0x198] sm:$0xff]
      %v1014 = vld [vmem:[#allocation2 + $0x1a0] sm:$0xff]
      %v1015 = vld [vmem:[#allocation2 + $0x1a8] sm:$0xff]
      %v1016 = vld [vmem:[#allocation2 + $0x1b0] sm:$0xff]
      %v1017 = vld [vmem:[#allocation2 + $0x1b8] sm:$0xff]
      %v1018 = vld [vmem:[#allocation2 + $0x1c0] sm:$0xff]
      %v1019 = vld [vmem:[#allocation2 + $0x1c8] sm:$0xff]
      %v1020 = vld [vmem:[#allocation2 + $0x1d0] sm:$0xff]
      %v1021 = vld [vmem:[#allocation2 + $0x1d8] sm:$0xff]
      %v1022 = vld [vmem:[#allocation2 + $0x1e0] sm:$0xff]
      %v1023 = vld [vmem:[#allocation2 + $0x1e8] sm:$0xff]
      %v1024 = vld [vmem:[#allocation2 + $0x1f0] sm:$0xff]
      %v1025 = vld [vmem:[#allocation2 + $0x1f8] sm:$0xff]
      %v1026 = vld [vmem:[#allocation2 + $0x200] sm:$0xff]
      %v1027 = vld [vmem:[#allocation2 + $0x208] sm:$0xff]
      %v1028 = vld [vmem:[#allocation2 + $0x210] sm:$0xff]
      %v1029 = vld [vmem:[#allocation2 + $0x218] sm:$0xff]
      %v1030 = vld [vmem:[#allocation2 + $0x220] sm:$0xff]
      %v1031 = vld [vmem:[#allocation2 + $0x228] sm:$0xff]
      %v1032 = vld [vmem:[#allocation2 + $0x230] sm:$0xff]
      %v1033 = vld [vmem:[#allocation2 + $0x238] sm:$0xff]
      %v1034 = vld [vmem:[%s5] sm:$0xff]
      %1036 = vset.pattern.permute.xlu0 0
      %1037 = vperm.xlu0 %1036, %v1034
      %v1038 = vpop.permute.xlu0 %1037
      %vm1040 = vcmask 130048
      %v1042 = vsel %vm1040, %v961, 0
      %1044 = vmatprep.subr.mxu0 %v1023
      %1045 = vmatpush1.msra.mxu0 %v1022
      %1046 = vmatprep.subr.mxu0 %v1019
      %1047 = vmatpush1.msra.mxu0 %v1018
      %1048 = vmatprep.subr.mxu0 %v1015
      %1049 = vmatpush1.msra.mxu0 %v1014
      %1050 = vmatprep.subr.mxu0 %v1011
      %1051 = vmatpush1.msra.mxu0 %v1010
      %1052 = vmatprep.subr.mxu0 %v1007
      %1053 = vmatpush1.msra.mxu0 %v1006
      %1054 = vmatprep.subr.mxu0 %v1003
      %1055 = vmatpush1.msra.mxu0 %v1002
      %1056 = vmatprep.subr.mxu0 %v999
      %1057 = vmatpush1.msra.mxu0 %v998
      %1058 = vmatprep.subr.mxu0 %v995
      %1059 = vmatpush1.msra.mxu0 %v994
      %1060 = vmatprep.subr.mxu0 %v991
      %1061 = vmatpush1.msra.mxu0 %v990
      %1062 = vmatprep.subr.mxu0 %v987
      %1063 = vmatpush1.msra.mxu0 %v986
      %1064 = vmatprep.subr.mxu0 %v983
      %1065 = vmatpush1.msra.mxu0 %v982
      %1066 = vmatprep.subr.mxu0 %v979
      %1067 = vmatpush1.msra.mxu0 %v978
      %1068 = vmatprep.subr.mxu0 %v975
      %1069 = vmatpush1.msra.mxu0 %v974
      %1070 = vmatprep.subr.mxu0 %v971
      %1071 = vmatpush1.msra.mxu0 %v970
      %1072 = vmatprep.subr.mxu0 %v967
      %1073 = vmatpush1.msra.mxu0 %v966
      %1074 = vmatprep.subr.mxu0 %v963
      %1075 = vmatpush1.msra.mxu0 %v962
      %1076 = vmatprep.subr.mxu0 0.0
      %1077 = vmatpush2.msra.mxu0 0.0
      %1078 = vmatprep.subr.mxu0 0.0
      %1079 = vmatpush2.msra.mxu0 0.0
      %1080 = vmatprep.subr.mxu0 0.0
      %1081 = vmatpush2.msra.mxu0 0.0
      %1082 = vmatprep.subr.mxu0 0.0
      %1083 = vmatpush2.msra.mxu0 0.0
      %1084 = vmatprep.subr.mxu0 0.0
      %1085 = vmatpush2.msra.mxu0 0.0
      %1086 = vmatprep.subr.mxu0 0.0
      %1087 = vmatpush2.msra.mxu0 0.0
      %1088 = vmatprep.subr.mxu0 0.0
      %1089 = vmatpush2.msra.mxu0 0.0
      %1090 = vmatprep.subr.mxu0 0.0
      %1091 = vmatpush2.msra.mxu0 0.0
      %1092 = vmatprep.subr.mxu0 0.0
      %1093 = vmatpush2.msra.mxu0 0.0
      %1094 = vmatprep.subr.mxu0 0.0
      %1095 = vmatpush2.msra.mxu0 0.0
      %1096 = vmatprep.subr.mxu0 0.0
      %1097 = vmatpush2.msra.mxu0 0.0
      %1098 = vmatprep.subr.mxu0 0.0
      %1099 = vmatpush2.msra.mxu0 0.0
      %1100 = vmatprep.subr.mxu0 0.0
      %1101 = vmatpush2.msra.mxu0 0.0
      %1102 = vmatprep.subr.mxu0 0.0
      %1103 = vmatpush2.msra.mxu0 0.0
      %1104 = vmatprep.subr.mxu0 %v1031
      %1105 = vmatpush2.msra.mxu0 %v1030
      %1106 = vmatprep.subr.mxu0 %v1027
      %1107 = vmatpush2.msra.mxu0 %v1026
      %1108 = vmatprep.mubr.f32.mxu0 %v1042
      %1109 = vmatmul.mubr.f32.gmra.mxu0 %v960
      %v1110 = vpop.f32.mrf.mxu0
      %v1111 = vadd.f32 %v1038, %v1110
      %v1112 = vpop.f32.mrf.mxu0
      %v1113 = vadd.f32 %v1038, %v1112
      %1114 = vdwg.mxu0
      %1115 = vmatprep.subr.mxu0 %v1025
      %1116 = vmatpush1.msra.mxu0 %v1024
      %1117 = vmatprep.subr.mxu0 %v1021
      %1118 = vmatpush1.msra.mxu0 %v1020
      %1119 = vmatprep.subr.mxu0 %v1017
      %1120 = vmatpush1.msra.mxu0 %v1016
      %1121 = vmatprep.subr.mxu0 %v1013
      %1122 = vmatpush1.msra.mxu0 %v1012
      %1123 = vmatprep.subr.mxu0 %v1009
      %1124 = vmatpush1.msra.mxu0 %v1008
      %1125 = vmatprep.subr.mxu0 %v1005
      %1126 = vmatpush1.msra.mxu0 %v1004
      %1127 = vmatprep.subr.mxu0 %v1001
      %1128 = vmatpush1.msra.mxu0 %v1000
      %1129 = vmatprep.subr.mxu0 %v997
      %1130 = vmatpush1.msra.mxu0 %v996
      %1131 = vmatprep.subr.mxu0 %v993
      %1132 = vmatpush1.msra.mxu0 %v992
      %1133 = vmatprep.subr.mxu0 %v989
      %1134 = vmatpush1.msra.mxu0 %v988
      %1135 = vmatprep.subr.mxu0 %v985
      %1136 = vmatpush1.msra.mxu0 %v984
      %1137 = vmatprep.subr.mxu0 %v981
      %1138 = vmatpush1.msra.mxu0 %v980
      %1139 = vmatprep.subr.mxu0 %v977
      %1140 = vmatpush1.msra.mxu0 %v976
      %1141 = vmatprep.subr.mxu0 %v973
      %1142 = vmatpush1.msra.mxu0 %v972
      %1143 = vmatprep.subr.mxu0 %v969
      %1144 = vmatpush1.msra.mxu0 %v968
      %1145 = vmatprep.subr.mxu0 %v965
      %1146 = vmatpush1.msra.mxu0 %v964
      %1147 = vmatprep.subr.mxu0 0.0
      %1148 = vmatpush2.msra.mxu0 0.0
      %1149 = vmatprep.subr.mxu0 0.0
      %1150 = vmatpush2.msra.mxu0 0.0
      %1151 = vmatprep.subr.mxu0 0.0
      %1152 = vmatpush2.msra.mxu0 0.0
      %1153 = vmatprep.subr.mxu0 0.0
      %1154 = vmatpush2.msra.mxu0 0.0
      %1155 = vmatprep.subr.mxu0 0.0
      %1156 = vmatpush2.msra.mxu0 0.0
      %1157 = vmatprep.subr.mxu0 0.0
      %1158 = vmatpush2.msra.mxu0 0.0
      %1159 = vmatprep.subr.mxu0 0.0
      %1160 = vmatpush2.msra.mxu0 0.0
      %1161 = vmatprep.subr.mxu0 0.0
      %1162 = vmatpush2.msra.mxu0 0.0
      %1163 = vmatprep.subr.mxu0 0.0
      %1164 = vmatpush2.msra.mxu0 0.0
      %1165 = vmatprep.subr.mxu0 0.0
      %1166 = vmatpush2.msra.mxu0 0.0
      %1167 = vmatprep.subr.mxu0 0.0
      %1168 = vmatpush2.msra.mxu0 0.0
      %1169 = vmatprep.subr.mxu0 0.0
      %1170 = vmatpush2.msra.mxu0 0.0
      %1171 = vmatprep.subr.mxu0 0.0
      %1172 = vmatpush2.msra.mxu0 0.0
      %1173 = vmatprep.subr.mxu0 0.0
      %1174 = vmatpush2.msra.mxu0 0.0
      %1175 = vmatprep.subr.mxu0 %v1033
      %1176 = vmatpush2.msra.mxu0 %v1032
      %1177 = vmatprep.subr.mxu0 %v1029
      %1178 = vmatpush2.msra.mxu0 %v1028
      %1179 = vmatprep.mubr.f32.mxu0 %v1042
      %1180 = vmatmul.mubr.f32.gmra.mxu0 %v960
      %v1181 = vpop.f32.mrf.mxu0
      %v1182 = vadd.f32 %v1038, %v1181
      %v1183 = vpop.f32.mrf.mxu0
      %v1184 = vadd.f32 %v1038, %v1183
      %1185 = vdwg.mxu0
      %1186 = vst [vmem:[%s251] sm:$0xff] %v1111
      %1187 = vst [vmem:[%s251 + $0x8] sm:$0xff] %v1113
      %1188 = vst [vmem:[%s251 + $0x10] sm:$0xff] %v1182
      %1189 = vst [vmem:[%s251 + $0x18] sm:$0xff] %v1184
      %p1190 = scmp.lt.s32.totalorder %s17, 1
      %s1191 = scalar_select %p1190, %s17, 1
      %s1192 = smul.addr %s1191, 4
      %s1193 = smul.addr %s1192, 8
      %s1194 = scalar_lea.vmem %s6, %s1193
      // Predicated region
      $region45: #{_lambda_.1} parent=43 // pred_check
        %p1195 = pneg %p166
      $region46: #{_lambda_.1} parent=43 // pred_check_branch
        %1197 = sbr.rel (%p1195) target = $region48
      $region47: #{_lambda_.1} parent=43 // pred_region
        _
      $region48: #{_lambda_.1} parent=43 // pred_fallthru
        _
    $region44: #{_lambda_.1} parent=5 // pred_fallthru
      _
    %p1198 = scmp.le.s32.totalorder 2, %s12
    // Predicated region
    $region49: #{_lambda_.1} parent=5 // pred_check
      %p1199 = pneg %p1198
    $region50: #{_lambda_.1} parent=5 // pred_check_branch
      %1201 = sbr.rel (%p1199) target = $region52
    $region51: #{_lambda_.1} parent=5 // pred_region
      %s1202 = ssub.s32 %s12, 2
      // Predicated region
      $region53: #{_lambda_.1} parent=51 // pred_check
        %p1203 = pneg %p172
      $region54: #{_lambda_.1} parent=51 // pred_check_branch
        %1205 = sbr.rel (%p1203) target = $region56
      $region55: #{_lambda_.1} parent=51 // pred_region
        %p1206 = scmp.lt.s32.totalorder %s18, 1
        %s1207 = scalar_select %p1206, %s18, 1
        %s1208 = smul.addr %s1207, 4
        %s1209 = smul.addr %s1208, 8
        %s1210 = scalar_lea.vmem %s6, %s1209
      $region56: #{_lambda_.1} parent=51 // pred_fallthru
        _
    $region52: #{_lambda_.1} parent=5 // pred_fallthru
      _
  $region6: #{_lambda_.1} parent=0 // loop_footer
    %s16 = sadd.s32 1, %s12
  $region7: #{_lambda_.1} parent=0 // loop_footer_branch
    %11 = sbr.rel target = $region3
  $region8: #{_lambda_.1} parent=0 // loop_exit
    _

</llo_original>
